<compile_context>
chip_gen: v5e
topology: v5e:2x2
jax: 0.10.0
libtpu: 0.0.40
codegen_flags: <defaults>
</compile_context>

<pallas_src>
import jax
import jax.numpy as jnp
from jax import lax
from jax.experimental import pallas as pl
from jax.experimental.pallas import tpu as pltpu

TOTAL_TICKS = 8        # matches the module's TOTAL_TICKS global
OUT_FEATURES = 88      # piano-roll pitch count from the module
OUT_PADDED = ((OUT_FEATURES + 127) // 128) * 128   # lane-dense output width (=128)


def _sigmoid(x):
    # 1 EUP tanh push + cheap VPU ops (instead of exp + reciprocal).
    return 0.5 * (jnp.tanh(0.5 * x) + 1.0)


# ---------------------------------------------------------------------------
# Fused Pallas kernel (entire decoder forward)
# ---------------------------------------------------------------------------
def _make_fused_decoder_kernel(num_layers, T, B, H):
    H4 = 4 * H
    L = num_layers

    def lstm_step(xg, h, c, whh):
        # xg already holds x_t @ W_ih + bias, so the serial dependence is only h @ W_hh.
        gates = xg + jnp.dot(h, whh, preferred_element_type=jnp.float32)
        sg = _sigmoid(gates)                      # one EUP push over the whole 4H slab
        i = sg[:, 0 * H:1 * H]                    # PyTorch gate order i, f, g, o
        f = sg[:, 1 * H:2 * H]
        o = sg[:, 3 * H:4 * H]
        g = jnp.tanh(gates[:, 2 * H:3 * H])
        c_new = f * c + i * g
        h_new = o * jnp.tanh(c_new)
        return h_new, c_new

    def kernel(*refs):
        z_ref, wf_ref, bf_ref, whh0_ref = refs[0:4]
        layer_refs = [refs[4 + 3 * i: 7 + 3 * i] for i in range(L - 1)]
        wout_ref, bout_ref = refs[4 + 3 * (L - 1): 6 + 3 * (L - 1)]
        o_ref = refs[-1]                          # (T*B, OUT_PADDED) output

        # Hoist recurrence weights / broadcast biases out of the unrolled loops.
        whh = [whh0_ref[...]] + [lr[1][...] for lr in layer_refs]
        wih = [None] + [lr[0][...] for lr in layer_refs]
        bias = [None] + [jnp.broadcast_to(lr[2][...], (B, H4)) for lr in layer_refs]

        # ---- layer 0: latent Linear + x@W_ih0 + biases, all T steps in one MXU dot ----
        # (per-t slices below are lane-aligned because 4*H == 128; keep 4H a multiple of
        #  128 if H is ever retuned)
        xg0 = (jnp.dot(z_ref[...], wf_ref[...], preferred_element_type=jnp.float32)
               + bf_ref[...])                                       # (B, T*4H)

        zero = jnp.zeros((B, H), jnp.float32)
        h = [zero] * L
        c = [zero] * L
        xg = [[None] * T for _ in range(L)]
        for t in range(T):
            xg[0][t] = xg0[:, t * H4:(t + 1) * H4]
        hs_out = [None] * T

        # ---- wavefront-interleaved (layer, time) unroll ----
        # Layer l's x_t@W_ih is computed as soon as h_t^{l-1} exists (off layer l's own
        # h@W_hh chain); dependent chain is L+T-1 steps instead of L*T.
        for wave in range(T + L - 1):
            for l in range(L):
                t = wave - l
                if 0 <= t < T:
                    h[l], c[l] = lstm_step(xg[l][t], h[l], c[l], whh[l])
                    if l + 1 < L:
                        xg[l + 1][t] = (jnp.dot(h[l], wih[l + 1],
                                                preferred_element_type=jnp.float32)
                                        + bias[l + 1])
                    else:
                        hs_out[t] = h[l]

        # ---- output Linear: activation slab built in registers, one unmasked store ----
        x_all = jnp.concatenate(hs_out, axis=0)                     # (T*B, H), t-major
        o_ref[...] = (jnp.dot(x_all, wout_ref[...], preferred_element_type=jnp.float32)
                      + bout_ref[...]).astype(o_ref.dtype)

    return kernel


# ---------------------------------------------------------------------------
# Forward wrapper (trace-time weight prep + single pallas_call)
# ---------------------------------------------------------------------------
def lstm_decoder_forward(z, params):
    B = z.shape[0]
    H = params["hidden_size"]
    L = params["num_layers"]
    T = TOTAL_TICKS
    H4 = 4 * H
    hp = lax.Precision.HIGHEST

    # Weight-only trace-time prep (no per-activation work is moved out of the kernel):
    #   fold latent_to_input into layer 0's input gates:
    #   xg0_t = z @ (W_in[:,tH:(t+1)H] @ W_ih0) + (b_in[tH:(t+1)H] @ W_ih0 + b_lstm0)
    latent = params["w_in"].shape[0]
    w_ih0 = params["w_ih"][0]                                          # (H, 4H)
    w_fold = jnp.einsum("lth,hg->ltg",
                        params["w_in"].reshape(latent, T, H), w_ih0,
                        precision=hp).reshape(latent, T * H4)          # (latent, T*4H)
    b_fold = (jnp.einsum("th,hg->tg",
                         params["b_in"].reshape(T, H), w_ih0, precision=hp)
              + params["b_lstm"][0][None, :]).reshape(1, T * H4)       # (1, T*4H)

    # Pad the output projection to a full 128-lane slab for unmasked stores.
    w_out_p = jnp.pad(params["w_out"], ((0, 0), (0, OUT_PADDED - OUT_FEATURES)))
    b_out_p = jnp.pad(params["b_out"], (0, OUT_PADDED - OUT_FEATURES)).reshape(1, OUT_PADDED)

    args = [z, w_fold, b_fold, params["w_hh"][0]]
    for l in range(1, L):
        # TODO(synk): nn.LSTM inter-layer dropout is training-only; eval forward has none.
        args += [params["w_ih"][l], params["w_hh"][l],
                 params["b_lstm"][l].reshape(1, H4)]
    args += [w_out_p, b_out_p]

    flops = 2 * (B * latent * T * H4            # folded latent Linear (+ layer-0 x@W_ih)
                 + L * T * B * H * H4           # h @ W_hh on the serial chain
                 + (L - 1) * T * B * H * H4     # per-step x @ W_ih, layers 1..L-1
                 + T * B * H * OUT_PADDED)      # output projection
    transcendentals = L * T * B * (H4 + 2 * H)  # sigmoid slab + tanh(g) + tanh(c)
    bytes_accessed = sum(int(a.size) * 4 for a in args) + T * B * OUT_PADDED * 4

    out = pl.pallas_call(
        _make_fused_decoder_kernel(L, T, B, H),
        out_shape=jax.ShapeDtypeStruct((T * B, OUT_PADDED), jnp.float32),
        in_specs=[pl.BlockSpec(memory_space=pltpu.MemorySpace.VMEM)] * len(args),
        out_specs=pl.BlockSpec(memory_space=pltpu.MemorySpace.VMEM),
        cost_estimate=pl.CostEstimate(flops=flops,
                                      transcendentals=transcendentals,
                                      bytes_accessed=bytes_accessed),
    )(*args)

    # (T*B, 128), t-major rows  ->  (B, T, 88)
    return out.reshape(T, B, OUT_PADDED)[:, :, :OUT_FEATURES].transpose(1, 0, 2)


# ---------------------------------------------------------------------------
# Pure-JAX reference (faithful PyTorch math order) for validation
# ---------------------------------------------------------------------------
def reference_forward(z, params):
    hp = lax.Precision.HIGHEST
    B = z.shape[0]
    H = params["hidden_size"]
    x = jnp.dot(z, params["w_in"], precision=hp) + params["b_in"]
    x = x.reshape(B, TOTAL_TICKS, H)
    for l in range(params["num_layers"]):
        w_ih, w_hh, b = params["w_ih"][l], params["w_hh"][l], params["b_lstm"][l]

        def step(carry, x_t, w_ih=w_ih, w_hh=w_hh, b=b):
            h, c = carry
            gates = (jnp.dot(x_t, w_ih, precision=hp)
                     + jnp.dot(h, w_hh, precision=hp) + b)
            i = jax.nn.sigmoid(gates[:, 0:H])
            f = jax.nn.sigmoid(gates[:, H:2 * H])
            g = jnp.tanh(gates[:, 2 * H:3 * H])
            o = jax.nn.sigmoid(gates[:, 3 * H:4 * H])
            c = f * c + i * g
            h = o * jnp.tanh(c)
            return (h, c), h

        init = (jnp.zeros((B, H), jnp.float32), jnp.zeros((B, H), jnp.float32))
        _, ys = lax.scan(step, init, jnp.transpose(x, (1, 0, 2)))
        x = jnp.transpose(ys, (1, 0, 2))
    y = (jnp.dot(x.reshape(B * TOTAL_TICKS, H), params["w_out"], precision=hp)
         + params["b_out"])
    return y.reshape(B, TOTAL_TICKS, OUT_FEATURES)


# ---------------------------------------------------------------------------
# Deterministic parameter init (PyTorch-like uniform(-1/sqrt(fan), 1/sqrt(fan)))
# ---------------------------------------------------------------------------
def init_params(key, latent_dims, hidden_size, num_layers):
    def uniform(k, shape, fan):
        bound = 1.0 / jnp.sqrt(fan)
        return jax.random.uniform(k, shape, jnp.float32, -bound, bound)

    keys = jax.random.split(key, 4 + 4 * num_layers)
    H = hidden_size
    params = {
        "hidden_size": H,
        "num_layers": num_layers,
        # latent_to_input: torch weight (H*T, latent) -> stored transposed (latent, H*T)
        "w_in": uniform(keys[0], (latent_dims, H * TOTAL_TICKS), latent_dims),
        "b_in": uniform(keys[1], (H * TOTAL_TICKS,), latent_dims),
        # output: torch weight (88, H) -> stored transposed (H, 88)
        "w_out": uniform(keys[2], (H, OUT_FEATURES), H),
        "b_out": uniform(keys[3], (OUT_FEATURES,), H),
        "w_ih": [],
        "w_hh": [],
        "b_lstm": [],
    }
    for l in range(num_layers):
        k0, k1, k2, k3 = keys[4 + 4 * l: 8 + 4 * l]
        # torch w_ih_l: (4H, in), w_hh_l: (4H, H) -> stored transposed
        params["w_ih"].append(uniform(k0, (H, 4 * H), H))
        params["w_hh"].append(uniform(k1, (H, 4 * H), H))
        b_ih = uniform(k2, (4 * H,), H)
        b_hh = uniform(k3, (4 * H,), H)
        params["b_lstm"].append(b_ih + b_hh)
    return params


if __name__ == "__main__":
    key = jax.random.PRNGKey(0)
    k_params, k_z = jax.random.split(key)

    latent_dims, hidden_size, num_layers = 16, 32, 2
    batch = 2

    params = init_params(k_params, latent_dims, hidden_size, num_layers)
    z = jax.random.normal(k_z, (batch, latent_dims), jnp.float32)

    out = jax.block_until_ready(lstm_decoder_forward(z, params))
    ref = reference_forward(z, params)

    assert out.shape == (batch, TOTAL_TICKS, OUT_FEATURES), out.shape
    assert jnp.allclose(out, ref, atol=1e-4, rtol=1e-4), float(jnp.max(jnp.abs(out - ref)))

    print("KERNEL_OK")
</pallas_src>

<mosaic_0001>
module attributes {stable_mosaic.version = 11 : i64} {
  func.func @kernel(%arg0: memref<2x16xf32, #tpu.memory_space<vmem>>, %arg1: memref<16x1024xf32, #tpu.memory_space<vmem>>, %arg2: memref<1x1024xf32, #tpu.memory_space<vmem>>, %arg3: memref<32x128xf32, #tpu.memory_space<vmem>>, %arg4: memref<32x128xf32, #tpu.memory_space<vmem>>, %arg5: memref<32x128xf32, #tpu.memory_space<vmem>>, %arg6: memref<1x128xf32, #tpu.memory_space<vmem>>, %arg7: memref<32x128xf32, #tpu.memory_space<vmem>>, %arg8: memref<1x128xf32, #tpu.memory_space<vmem>>, %arg9: memref<16x128xf32, #tpu.memory_space<vmem>>) attributes {dimension_semantics = [], scalar_prefetch = 0 : i64, scratch_operands = 0 : i64, tpu.core_type = #tpu.core_type<tc>} {
    %c0 = arith.constant 0 : index
    %c0_0 = arith.constant 0 : index
    %0 = vector.load %arg3[%c0, %c0_0] : memref<32x128xf32, #tpu.memory_space<vmem>>, vector<32x128xf32>
    %c0_1 = arith.constant 0 : index
    %c0_2 = arith.constant 0 : index
    %1 = vector.load %arg5[%c0_1, %c0_2] : memref<32x128xf32, #tpu.memory_space<vmem>>, vector<32x128xf32>
    %c0_3 = arith.constant 0 : index
    %c0_4 = arith.constant 0 : index
    %2 = vector.load %arg4[%c0_3, %c0_4] : memref<32x128xf32, #tpu.memory_space<vmem>>, vector<32x128xf32>
    %c0_5 = arith.constant 0 : index
    %c0_6 = arith.constant 0 : index
    %3 = vector.load %arg6[%c0_5, %c0_6] : memref<1x128xf32, #tpu.memory_space<vmem>>, vector<1x128xf32>
    %4 = vector.shape_cast %3 : vector<1x128xf32> to vector<1x128xf32>
    %5 = vector.broadcast %4 : vector<1x128xf32> to vector<2x128xf32>
    %c0_7 = arith.constant 0 : index
    %c0_8 = arith.constant 0 : index
    %6 = vector.load %arg0[%c0_7, %c0_8] : memref<2x16xf32, #tpu.memory_space<vmem>>, vector<2x16xf32>
    %c0_9 = arith.constant 0 : index
    %c0_10 = arith.constant 0 : index
    %7 = vector.load %arg1[%c0_9, %c0_10] : memref<16x1024xf32, #tpu.memory_space<vmem>>, vector<16x1024xf32>
    %cst = arith.constant dense<0.000000e+00> : vector<2x1024xf32>
    %8 = tpu.matmul %6, %7, %cst {dimension_numbers = #tpu.dot_dimension_numbers<[1], [0], [0], [1], [0, 0, 1, 1], [], []>} : vector<2x16xf32>, vector<16x1024xf32>, vector<2x1024xf32> -> vector<2x1024xf32>
    %c0_11 = arith.constant 0 : index
    %c0_12 = arith.constant 0 : index
    %9 = vector.load %arg2[%c0_11, %c0_12] : memref<1x1024xf32, #tpu.memory_space<vmem>>, vector<1x1024xf32>
    %10 = vector.broadcast %9 : vector<1x1024xf32> to vector<2x1024xf32>
    %11 = arith.addf %8, %10 : vector<2x1024xf32>
    %cst_13 = arith.constant 0.000000e+00 : f32
    %12 = vector.broadcast %cst_13 : f32 to vector<2x32xf32>
    %13 = vector.extract_strided_slice %11 {offsets = [0, 0], sizes = [2, 128], strides = [1, 1]} : vector<2x1024xf32> to vector<2x128xf32>
    %14 = vector.extract_strided_slice %11 {offsets = [0, 128], sizes = [2, 128], strides = [1, 1]} : vector<2x1024xf32> to vector<2x128xf32>
    %15 = vector.extract_strided_slice %11 {offsets = [0, 256], sizes = [2, 128], strides = [1, 1]} : vector<2x1024xf32> to vector<2x128xf32>
    %16 = vector.extract_strided_slice %11 {offsets = [0, 384], sizes = [2, 128], strides = [1, 1]} : vector<2x1024xf32> to vector<2x128xf32>
    %17 = vector.extract_strided_slice %11 {offsets = [0, 512], sizes = [2, 128], strides = [1, 1]} : vector<2x1024xf32> to vector<2x128xf32>
    %18 = vector.extract_strided_slice %11 {offsets = [0, 640], sizes = [2, 128], strides = [1, 1]} : vector<2x1024xf32> to vector<2x128xf32>
    %19 = vector.extract_strided_slice %11 {offsets = [0, 768], sizes = [2, 128], strides = [1, 1]} : vector<2x1024xf32> to vector<2x128xf32>
    %20 = vector.extract_strided_slice %11 {offsets = [0, 896], sizes = [2, 128], strides = [1, 1]} : vector<2x1024xf32> to vector<2x128xf32>
    %cst_14 = arith.constant dense<0.000000e+00> : vector<2x128xf32>
    %21 = tpu.matmul %12, %0, %cst_14 {dimension_numbers = #tpu.dot_dimension_numbers<[1], [0], [0], [1], [0, 0, 1, 1], [], []>} : vector<2x32xf32>, vector<32x128xf32>, vector<2x128xf32> -> vector<2x128xf32>
    %22 = arith.addf %13, %21 : vector<2x128xf32>
    %cst_15 = arith.constant 5.000000e-01 : f32
    %23 = vector.broadcast %cst_15 : f32 to vector<2x128xf32>
    %24 = arith.mulf %23, %22 : vector<2x128xf32>
    %25 = math.tanh %24 : vector<2x128xf32>
    %cst_16 = arith.constant 1.000000e+00 : f32
    %26 = vector.broadcast %cst_16 : f32 to vector<2x128xf32>
    %27 = arith.addf %25, %26 : vector<2x128xf32>
    %cst_17 = arith.constant 5.000000e-01 : f32
    %28 = vector.broadcast %cst_17 : f32 to vector<2x128xf32>
    %29 = arith.mulf %28, %27 : vector<2x128xf32>
    %30 = vector.extract_strided_slice %29 {offsets = [0, 0], sizes = [2, 32], strides = [1, 1]} : vector<2x128xf32> to vector<2x32xf32>
    %31 = vector.extract_strided_slice %29 {offsets = [0, 32], sizes = [2, 32], strides = [1, 1]} : vector<2x128xf32> to vector<2x32xf32>
    %32 = vector.extract_strided_slice %29 {offsets = [0, 96], sizes = [2, 32], strides = [1, 1]} : vector<2x128xf32> to vector<2x32xf32>
    %33 = vector.extract_strided_slice %22 {offsets = [0, 64], sizes = [2, 32], strides = [1, 1]} : vector<2x128xf32> to vector<2x32xf32>
    %34 = math.tanh %33 : vector<2x32xf32>
    %35 = arith.mulf %31, %12 : vector<2x32xf32>
    %36 = arith.mulf %30, %34 : vector<2x32xf32>
    %37 = arith.addf %35, %36 : vector<2x32xf32>
    %38 = math.tanh %37 : vector<2x32xf32>
    %39 = arith.mulf %32, %38 : vector<2x32xf32>
    %cst_18 = arith.constant dense<0.000000e+00> : vector<2x128xf32>
    %40 = tpu.matmul %39, %2, %cst_18 {dimension_numbers = #tpu.dot_dimension_numbers<[1], [0], [0], [1], [0, 0, 1, 1], [], []>} : vector<2x32xf32>, vector<32x128xf32>, vector<2x128xf32> -> vector<2x128xf32>
    %41 = arith.addf %40, %5 : vector<2x128xf32>
    %cst_19 = arith.constant dense<0.000000e+00> : vector<2x128xf32>
    %42 = tpu.matmul %39, %0, %cst_19 {dimension_numbers = #tpu.dot_dimension_numbers<[1], [0], [0], [1], [0, 0, 1, 1], [], []>} : vector<2x32xf32>, vector<32x128xf32>, vector<2x128xf32> -> vector<2x128xf32>
    %43 = arith.addf %14, %42 : vector<2x128xf32>
    %cst_20 = arith.constant 5.000000e-01 : f32
    %44 = vector.broadcast %cst_20 : f32 to vector<2x128xf32>
    %45 = arith.mulf %44, %43 : vector<2x128xf32>
    %46 = math.tanh %45 : vector<2x128xf32>
    %cst_21 = arith.constant 1.000000e+00 : f32
    %47 = vector.broadcast %cst_21 : f32 to vector<2x128xf32>
    %48 = arith.addf %46, %47 : vector<2x128xf32>
    %cst_22 = arith.constant 5.000000e-01 : f32
    %49 = vector.broadcast %cst_22 : f32 to vector<2x128xf32>
    %50 = arith.mulf %49, %48 : vector<2x128xf32>
    %51 = vector.extract_strided_slice %50 {offsets = [0, 0], sizes = [2, 32], strides = [1, 1]} : vector<2x128xf32> to vector<2x32xf32>
    %52 = vector.extract_strided_slice %50 {offsets = [0, 32], sizes = [2, 32], strides = [1, 1]} : vector<2x128xf32> to vector<2x32xf32>
    %53 = vector.extract_strided_slice %50 {offsets = [0, 96], sizes = [2, 32], strides = [1, 1]} : vector<2x128xf32> to vector<2x32xf32>
    %54 = vector.extract_strided_slice %43 {offsets = [0, 64], sizes = [2, 32], strides = [1, 1]} : vector<2x128xf32> to vector<2x32xf32>
    %55 = math.tanh %54 : vector<2x32xf32>
    %56 = arith.mulf %52, %37 : vector<2x32xf32>
    %57 = arith.mulf %51, %55 : vector<2x32xf32>
    %58 = arith.addf %56, %57 : vector<2x32xf32>
    %59 = math.tanh %58 : vector<2x32xf32>
    %60 = arith.mulf %53, %59 : vector<2x32xf32>
    %cst_23 = arith.constant dense<0.000000e+00> : vector<2x128xf32>
    %61 = tpu.matmul %60, %2, %cst_23 {dimension_numbers = #tpu.dot_dimension_numbers<[1], [0], [0], [1], [0, 0, 1, 1], [], []>} : vector<2x32xf32>, vector<32x128xf32>, vector<2x128xf32> -> vector<2x128xf32>
    %62 = arith.addf %61, %5 : vector<2x128xf32>
    %cst_24 = arith.constant dense<0.000000e+00> : vector<2x128xf32>
    %63 = tpu.matmul %12, %1, %cst_24 {dimension_numbers = #tpu.dot_dimension_numbers<[1], [0], [0], [1], [0, 0, 1, 1], [], []>} : vector<2x32xf32>, vector<32x128xf32>, vector<2x128xf32> -> vector<2x128xf32>
    %64 = arith.addf %41, %63 : vector<2x128xf32>
    %cst_25 = arith.constant 5.000000e-01 : f32
    %65 = vector.broadcast %cst_25 : f32 to vector<2x128xf32>
    %66 = arith.mulf %65, %64 : vector<2x128xf32>
    %67 = math.tanh %66 : vector<2x128xf32>
    %cst_26 = arith.constant 1.000000e+00 : f32
    %68 = vector.broadcast %cst_26 : f32 to vector<2x128xf32>
    %69 = arith.addf %67, %68 : vector<2x128xf32>
    %cst_27 = arith.constant 5.000000e-01 : f32
    %70 = vector.broadcast %cst_27 : f32 to vector<2x128xf32>
    %71 = arith.mulf %70, %69 : vector<2x128xf32>
    %72 = vector.extract_strided_slice %71 {offsets = [0, 0], sizes = [2, 32], strides = [1, 1]} : vector<2x128xf32> to vector<2x32xf32>
    %73 = vector.extract_strided_slice %71 {offsets = [0, 32], sizes = [2, 32], strides = [1, 1]} : vector<2x128xf32> to vector<2x32xf32>
    %74 = vector.extract_strided_slice %71 {offsets = [0, 96], sizes = [2, 32], strides = [1, 1]} : vector<2x128xf32> to vector<2x32xf32>
    %75 = vector.extract_strided_slice %64 {offsets = [0, 64], sizes = [2, 32], strides = [1, 1]} : vector<2x128xf32> to vector<2x32xf32>
    %76 = math.tanh %75 : vector<2x32xf32>
    %77 = arith.mulf %73, %12 : vector<2x32xf32>
    %78 = arith.mulf %72, %76 : vector<2x32xf32>
    %79 = arith.addf %77, %78 : vector<2x32xf32>
    %80 = math.tanh %79 : vector<2x32xf32>
    %81 = arith.mulf %74, %80 : vector<2x32xf32>
    %cst_28 = arith.constant dense<0.000000e+00> : vector<2x128xf32>
    %82 = tpu.matmul %60, %0, %cst_28 {dimension_numbers = #tpu.dot_dimension_numbers<[1], [0], [0], [1], [0, 0, 1, 1], [], []>} : vector<2x32xf32>, vector<32x128xf32>, vector<2x128xf32> -> vector<2x128xf32>
    %83 = arith.addf %15, %82 : vector<2x128xf32>
    %cst_29 = arith.constant 5.000000e-01 : f32
    %84 = vector.broadcast %cst_29 : f32 to vector<2x128xf32>
    %85 = arith.mulf %84, %83 : vector<2x128xf32>
    %86 = math.tanh %85 : vector<2x128xf32>
    %cst_30 = arith.constant 1.000000e+00 : f32
    %87 = vector.broadcast %cst_30 : f32 to vector<2x128xf32>
    %88 = arith.addf %86, %87 : vector<2x128xf32>
    %cst_31 = arith.constant 5.000000e-01 : f32
    %89 = vector.broadcast %cst_31 : f32 to vector<2x128xf32>
    %90 = arith.mulf %89, %88 : vector<2x128xf32>
    %91 = vector.extract_strided_slice %90 {offsets = [0, 0], sizes = [2, 32], strides = [1, 1]} : vector<2x128xf32> to vector<2x32xf32>
    %92 = vector.extract_strided_slice %90 {offsets = [0, 32], sizes = [2, 32], strides = [1, 1]} : vector<2x128xf32> to vector<2x32xf32>
    %93 = vector.extract_strided_slice %90 {offsets = [0, 96], sizes = [2, 32], strides = [1, 1]} : vector<2x128xf32> to vector<2x32xf32>
    %94 = vector.extract_strided_slice %83 {offsets = [0, 64], sizes = [2, 32], strides = [1, 1]} : vector<2x128xf32> to vector<2x32xf32>
    %95 = math.tanh %94 : vector<2x32xf32>
    %96 = arith.mulf %92, %58 : vector<2x32xf32>
    %97 = arith.mulf %91, %95 : vector<2x32xf32>
    %98 = arith.addf %96, %97 : vector<2x32xf32>
    %99 = math.tanh %98 : vector<2x32xf32>
    %100 = arith.mulf %93, %99 : vector<2x32xf32>
    %cst_32 = arith.constant dense<0.000000e+00> : vector<2x128xf32>
    %101 = tpu.matmul %100, %2, %cst_32 {dimension_numbers = #tpu.dot_dimension_numbers<[1], [0], [0], [1], [0, 0, 1, 1], [], []>} : vector<2x32xf32>, vector<32x128xf32>, vector<2x128xf32> -> vector<2x128xf32>
    %102 = arith.addf %101, %5 : vector<2x128xf32>
    %cst_33 = arith.constant dense<0.000000e+00> : vector<2x128xf32>
    %103 = tpu.matmul %81, %1, %cst_33 {dimension_numbers = #tpu.dot_dimension_numbers<[1], [0], [0], [1], [0, 0, 1, 1], [], []>} : vector<2x32xf32>, vector<32x128xf32>, vector<2x128xf32> -> vector<2x128xf32>
    %104 = arith.addf %62, %103 : vector<2x128xf32>
    %cst_34 = arith.constant 5.000000e-01 : f32
    %105 = vector.broadcast %cst_34 : f32 to vector<2x128xf32>
    %106 = arith.mulf %105, %104 : vector<2x128xf32>
    %107 = math.tanh %106 : vector<2x128xf32>
    %cst_35 = arith.constant 1.000000e+00 : f32
    %108 = vector.broadcast %cst_35 : f32 to vector<2x128xf32>
    %109 = arith.addf %107, %108 : vector<2x128xf32>
    %cst_36 = arith.constant 5.000000e-01 : f32
    %110 = vector.broadcast %cst_36 : f32 to vector<2x128xf32>
    %111 = arith.mulf %110, %109 : vector<2x128xf32>
    %112 = vector.extract_strided_slice %111 {offsets = [0, 0], sizes = [2, 32], strides = [1, 1]} : vector<2x128xf32> to vector<2x32xf32>
    %113 = vector.extract_strided_slice %111 {offsets = [0, 32], sizes = [2, 32], strides = [1, 1]} : vector<2x128xf32> to vector<2x32xf32>
    %114 = vector.extract_strided_slice %111 {offsets = [0, 96], sizes = [2, 32], strides = [1, 1]} : vector<2x128xf32> to vector<2x32xf32>
    %115 = vector.extract_strided_slice %104 {offsets = [0, 64], sizes = [2, 32], strides = [1, 1]} : vector<2x128xf32> to vector<2x32xf32>
    %116 = math.tanh %115 : vector<2x32xf32>
    %117 = arith.mulf %113, %79 : vector<2x32xf32>
    %118 = arith.mulf %112, %116 : vector<2x32xf32>
    %119 = arith.addf %117, %118 : vector<2x32xf32>
    %120 = math.tanh %119 : vector<2x32xf32>
    %121 = arith.mulf %114, %120 : vector<2x32xf32>
    %cst_37 = arith.constant dense<0.000000e+00> : vector<2x128xf32>
    %122 = tpu.matmul %100, %0, %cst_37 {dimension_numbers = #tpu.dot_dimension_numbers<[1], [0], [0], [1], [0, 0, 1, 1], [], []>} : vector<2x32xf32>, vector<32x128xf32>, vector<2x128xf32> -> vector<2x128xf32>
    %123 = arith.addf %16, %122 : vector<2x128xf32>
    %cst_38 = arith.constant 5.000000e-01 : f32
    %124 = vector.broadcast %cst_38 : f32 to vector<2x128xf32>
    %125 = arith.mulf %124, %123 : vector<2x128xf32>
    %126 = math.tanh %125 : vector<2x128xf32>
    %cst_39 = arith.constant 1.000000e+00 : f32
    %127 = vector.broadcast %cst_39 : f32 to vector<2x128xf32>
    %128 = arith.addf %126, %127 : vector<2x128xf32>
    %cst_40 = arith.constant 5.000000e-01 : f32
    %129 = vector.broadcast %cst_40 : f32 to vector<2x128xf32>
    %130 = arith.mulf %129, %128 : vector<2x128xf32>
    %131 = vector.extract_strided_slice %130 {offsets = [0, 0], sizes = [2, 32], strides = [1, 1]} : vector<2x128xf32> to vector<2x32xf32>
    %132 = vector.extract_strided_slice %130 {offsets = [0, 32], sizes = [2, 32], strides = [1, 1]} : vector<2x128xf32> to vector<2x32xf32>
    %133 = vector.extract_strided_slice %130 {offsets = [0, 96], sizes = [2, 32], strides = [1, 1]} : vector<2x128xf32> to vector<2x32xf32>
    %134 = vector.extract_strided_slice %123 {offsets = [0, 64], sizes = [2, 32], strides = [1, 1]} : vector<2x128xf32> to vector<2x32xf32>
    %135 = math.tanh %134 : vector<2x32xf32>
    %136 = arith.mulf %132, %98 : vector<2x32xf32>
    %137 = arith.mulf %131, %135 : vector<2x32xf32>
    %138 = arith.addf %136, %137 : vector<2x32xf32>
    %139 = math.tanh %138 : vector<2x32xf32>
    %140 = arith.mulf %133, %139 : vector<2x32xf32>
    %cst_41 = arith.constant dense<0.000000e+00> : vector<2x128xf32>
    %141 = tpu.matmul %140, %2, %cst_41 {dimension_numbers = #tpu.dot_dimension_numbers<[1], [0], [0], [1], [0, 0, 1, 1], [], []>} : vector<2x32xf32>, vector<32x128xf32>, vector<2x128xf32> -> vector<2x128xf32>
    %142 = arith.addf %141, %5 : vector<2x128xf32>
    %cst_42 = arith.constant dense<0.000000e+00> : vector<2x128xf32>
    %143 = tpu.matmul %121, %1, %cst_42 {dimension_numbers = #tpu.dot_dimension_numbers<[1], [0], [0], [1], [0, 0, 1, 1], [], []>} : vector<2x32xf32>, vector<32x128xf32>, vector<2x128xf32> -> vector<2x128xf32>
    %144 = arith.addf %102, %143 : vector<2x128xf32>
    %cst_43 = arith.constant 5.000000e-01 : f32
    %145 = vector.broadcast %cst_43 : f32 to vector<2x128xf32>
    %146 = arith.mulf %145, %144 : vector<2x128xf32>
    %147 = math.tanh %146 : vector<2x128xf32>
    %cst_44 = arith.constant 1.000000e+00 : f32
    %148 = vector.broadcast %cst_44 : f32 to vector<2x128xf32>
    %149 = arith.addf %147, %148 : vector<2x128xf32>
    %cst_45 = arith.constant 5.000000e-01 : f32
    %150 = vector.broadcast %cst_45 : f32 to vector<2x128xf32>
    %151 = arith.mulf %150, %149 : vector<2x128xf32>
    %152 = vector.extract_strided_slice %151 {offsets = [0, 0], sizes = [2, 32], strides = [1, 1]} : vector<2x128xf32> to vector<2x32xf32>
    %153 = vector.extract_strided_slice %151 {offsets = [0, 32], sizes = [2, 32], strides = [1, 1]} : vector<2x128xf32> to vector<2x32xf32>
    %154 = vector.extract_strided_slice %151 {offsets = [0, 96], sizes = [2, 32], strides = [1, 1]} : vector<2x128xf32> to vector<2x32xf32>
    %155 = vector.extract_strided_slice %144 {offsets = [0, 64], sizes = [2, 32], strides = [1, 1]} : vector<2x128xf32> to vector<2x32xf32>
    %156 = math.tanh %155 : vector<2x32xf32>
    %157 = arith.mulf %153, %119 : vector<2x32xf32>
    %158 = arith.mulf %152, %156 : vector<2x32xf32>
    %159 = arith.addf %157, %158 : vector<2x32xf32>
    %160 = math.tanh %159 : vector<2x32xf32>
    %161 = arith.mulf %154, %160 : vector<2x32xf32>
    %cst_46 = arith.constant dense<0.000000e+00> : vector<2x128xf32>
    %162 = tpu.matmul %140, %0, %cst_46 {dimension_numbers = #tpu.dot_dimension_numbers<[1], [0], [0], [1], [0, 0, 1, 1], [], []>} : vector<2x32xf32>, vector<32x128xf32>, vector<2x128xf32> -> vector<2x128xf32>
    %163 = arith.addf %17, %162 : vector<2x128xf32>
    %cst_47 = arith.constant 5.000000e-01 : f32
    %164 = vector.broadcast %cst_47 : f32 to vector<2x128xf32>
    %165 = arith.mulf %164, %163 : vector<2x128xf32>
    %166 = math.tanh %165 : vector<2x128xf32>
    %cst_48 = arith.constant 1.000000e+00 : f32
    %167 = vector.broadcast %cst_48 : f32 to vector<2x128xf32>
    %168 = arith.addf %166, %167 : vector<2x128xf32>
    %cst_49 = arith.constant 5.000000e-01 : f32
    %169 = vector.broadcast %cst_49 : f32 to vector<2x128xf32>
    %170 = arith.mulf %169, %168 : vector<2x128xf32>
    %171 = vector.extract_strided_slice %170 {offsets = [0, 0], sizes = [2, 32], strides = [1, 1]} : vector<2x128xf32> to vector<2x32xf32>
    %172 = vector.extract_strided_slice %170 {offsets = [0, 32], sizes = [2, 32], strides = [1, 1]} : vector<2x128xf32> to vector<2x32xf32>
    %173 = vector.extract_strided_slice %170 {offsets = [0, 96], sizes = [2, 32], strides = [1, 1]} : vector<2x128xf32> to vector<2x32xf32>
    %174 = vector.extract_strided_slice %163 {offsets = [0, 64], sizes = [2, 32], strides = [1, 1]} : vector<2x128xf32> to vector<2x32xf32>
    %175 = math.tanh %174 : vector<2x32xf32>
    %176 = arith.mulf %172, %138 : vector<2x32xf32>
    %177 = arith.mulf %171, %175 : vector<2x32xf32>
    %178 = arith.addf %176, %177 : vector<2x32xf32>
    %179 = math.tanh %178 : vector<2x32xf32>
    %180 = arith.mulf %173, %179 : vector<2x32xf32>
    %cst_50 = arith.constant dense<0.000000e+00> : vector<2x128xf32>
    %181 = tpu.matmul %180, %2, %cst_50 {dimension_numbers = #tpu.dot_dimension_numbers<[1], [0], [0], [1], [0, 0, 1, 1], [], []>} : vector<2x32xf32>, vector<32x128xf32>, vector<2x128xf32> -> vector<2x128xf32>
    %182 = arith.addf %181, %5 : vector<2x128xf32>
    %cst_51 = arith.constant dense<0.000000e+00> : vector<2x128xf32>
    %183 = tpu.matmul %161, %1, %cst_51 {dimension_numbers = #tpu.dot_dimension_numbers<[1], [0], [0], [1], [0, 0, 1, 1], [], []>} : vector<2x32xf32>, vector<32x128xf32>, vector<2x128xf32> -> vector<2x128xf32>
    %184 = arith.addf %142, %183 : vector<2x128xf32>
    %cst_52 = arith.constant 5.000000e-01 : f32
    %185 = vector.broadcast %cst_52 : f32 to vector<2x128xf32>
    %186 = arith.mulf %185, %184 : vector<2x128xf32>
    %187 = math.tanh %186 : vector<2x128xf32>
    %cst_53 = arith.constant 1.000000e+00 : f32
    %188 = vector.broadcast %cst_53 : f32 to vector<2x128xf32>
    %189 = arith.addf %187, %188 : vector<2x128xf32>
    %cst_54 = arith.constant 5.000000e-01 : f32
    %190 = vector.broadcast %cst_54 : f32 to vector<2x128xf32>
    %191 = arith.mulf %190, %189 : vector<2x128xf32>
    %192 = vector.extract_strided_slice %191 {offsets = [0, 0], sizes = [2, 32], strides = [1, 1]} : vector<2x128xf32> to vector<2x32xf32>
    %193 = vector.extract_strided_slice %191 {offsets = [0, 32], sizes = [2, 32], strides = [1, 1]} : vector<2x128xf32> to vector<2x32xf32>
    %194 = vector.extract_strided_slice %191 {offsets = [0, 96], sizes = [2, 32], strides = [1, 1]} : vector<2x128xf32> to vector<2x32xf32>
    %195 = vector.extract_strided_slice %184 {offsets = [0, 64], sizes = [2, 32], strides = [1, 1]} : vector<2x128xf32> to vector<2x32xf32>
    %196 = math.tanh %195 : vector<2x32xf32>
    %197 = arith.mulf %193, %159 : vector<2x32xf32>
    %198 = arith.mulf %192, %196 : vector<2x32xf32>
    %199 = arith.addf %197, %198 : vector<2x32xf32>
    %200 = math.tanh %199 : vector<2x32xf32>
    %201 = arith.mulf %194, %200 : vector<2x32xf32>
    %cst_55 = arith.constant dense<0.000000e+00> : vector<2x128xf32>
    %202 = tpu.matmul %180, %0, %cst_55 {dimension_numbers = #tpu.dot_dimension_numbers<[1], [0], [0], [1], [0, 0, 1, 1], [], []>} : vector<2x32xf32>, vector<32x128xf32>, vector<2x128xf32> -> vector<2x128xf32>
    %203 = arith.addf %18, %202 : vector<2x128xf32>
    %cst_56 = arith.constant 5.000000e-01 : f32
    %204 = vector.broadcast %cst_56 : f32 to vector<2x128xf32>
    %205 = arith.mulf %204, %203 : vector<2x128xf32>
    %206 = math.tanh %205 : vector<2x128xf32>
    %cst_57 = arith.constant 1.000000e+00 : f32
    %207 = vector.broadcast %cst_57 : f32 to vector<2x128xf32>
    %208 = arith.addf %206, %207 : vector<2x128xf32>
    %cst_58 = arith.constant 5.000000e-01 : f32
    %209 = vector.broadcast %cst_58 : f32 to vector<2x128xf32>
    %210 = arith.mulf %209, %208 : vector<2x128xf32>
    %211 = vector.extract_strided_slice %210 {offsets = [0, 0], sizes = [2, 32], strides = [1, 1]} : vector<2x128xf32> to vector<2x32xf32>
    %212 = vector.extract_strided_slice %210 {offsets = [0, 32], sizes = [2, 32], strides = [1, 1]} : vector<2x128xf32> to vector<2x32xf32>
    %213 = vector.extract_strided_slice %210 {offsets = [0, 96], sizes = [2, 32], strides = [1, 1]} : vector<2x128xf32> to vector<2x32xf32>
    %214 = vector.extract_strided_slice %203 {offsets = [0, 64], sizes = [2, 32], strides = [1, 1]} : vector<2x128xf32> to vector<2x32xf32>
    %215 = math.tanh %214 : vector<2x32xf32>
    %216 = arith.mulf %212, %178 : vector<2x32xf32>
    %217 = arith.mulf %211, %215 : vector<2x32xf32>
    %218 = arith.addf %216, %217 : vector<2x32xf32>
    %219 = math.tanh %218 : vector<2x32xf32>
    %220 = arith.mulf %213, %219 : vector<2x32xf32>
    %cst_59 = arith.constant dense<0.000000e+00> : vector<2x128xf32>
    %221 = tpu.matmul %220, %2, %cst_59 {dimension_numbers = #tpu.dot_dimension_numbers<[1], [0], [0], [1], [0, 0, 1, 1], [], []>} : vector<2x32xf32>, vector<32x128xf32>, vector<2x128xf32> -> vector<2x128xf32>
    %222 = arith.addf %221, %5 : vector<2x128xf32>
    %cst_60 = arith.constant dense<0.000000e+00> : vector<2x128xf32>
    %223 = tpu.matmul %201, %1, %cst_60 {dimension_numbers = #tpu.dot_dimension_numbers<[1], [0], [0], [1], [0, 0, 1, 1], [], []>} : vector<2x32xf32>, vector<32x128xf32>, vector<2x128xf32> -> vector<2x128xf32>
    %224 = arith.addf %182, %223 : vector<2x128xf32>
    %cst_61 = arith.constant 5.000000e-01 : f32
    %225 = vector.broadcast %cst_61 : f32 to vector<2x128xf32>
    %226 = arith.mulf %225, %224 : vector<2x128xf32>
    %227 = math.tanh %226 : vector<2x128xf32>
    %cst_62 = arith.constant 1.000000e+00 : f32
    %228 = vector.broadcast %cst_62 : f32 to vector<2x128xf32>
    %229 = arith.addf %227, %228 : vector<2x128xf32>
    %cst_63 = arith.constant 5.000000e-01 : f32
    %230 = vector.broadcast %cst_63 : f32 to vector<2x128xf32>
    %231 = arith.mulf %230, %229 : vector<2x128xf32>
    %232 = vector.extract_strided_slice %231 {offsets = [0, 0], sizes = [2, 32], strides = [1, 1]} : vector<2x128xf32> to vector<2x32xf32>
    %233 = vector.extract_strided_slice %231 {offsets = [0, 32], sizes = [2, 32], strides = [1, 1]} : vector<2x128xf32> to vector<2x32xf32>
    %234 = vector.extract_strided_slice %231 {offsets = [0, 96], sizes = [2, 32], strides = [1, 1]} : vector<2x128xf32> to vector<2x32xf32>
    %235 = vector.extract_strided_slice %224 {offsets = [0, 64], sizes = [2, 32], strides = [1, 1]} : vector<2x128xf32> to vector<2x32xf32>
    %236 = math.tanh %235 : vector<2x32xf32>
    %237 = arith.mulf %233, %199 : vector<2x32xf32>
    %238 = arith.mulf %232, %236 : vector<2x32xf32>
    %239 = arith.addf %237, %238 : vector<2x32xf32>
    %240 = math.tanh %239 : vector<2x32xf32>
    %241 = arith.mulf %234, %240 : vector<2x32xf32>
    %cst_64 = arith.constant dense<0.000000e+00> : vector<2x128xf32>
    %242 = tpu.matmul %220, %0, %cst_64 {dimension_numbers = #tpu.dot_dimension_numbers<[1], [0], [0], [1], [0, 0, 1, 1], [], []>} : vector<2x32xf32>, vector<32x128xf32>, vector<2x128xf32> -> vector<2x128xf32>
    %243 = arith.addf %19, %242 : vector<2x128xf32>
    %cst_65 = arith.constant 5.000000e-01 : f32
    %244 = vector.broadcast %cst_65 : f32 to vector<2x128xf32>
    %245 = arith.mulf %244, %243 : vector<2x128xf32>
    %246 = math.tanh %245 : vector<2x128xf32>
    %cst_66 = arith.constant 1.000000e+00 : f32
    %247 = vector.broadcast %cst_66 : f32 to vector<2x128xf32>
    %248 = arith.addf %246, %247 : vector<2x128xf32>
    %cst_67 = arith.constant 5.000000e-01 : f32
    %249 = vector.broadcast %cst_67 : f32 to vector<2x128xf32>
    %250 = arith.mulf %249, %248 : vector<2x128xf32>
    %251 = vector.extract_strided_slice %250 {offsets = [0, 0], sizes = [2, 32], strides = [1, 1]} : vector<2x128xf32> to vector<2x32xf32>
    %252 = vector.extract_strided_slice %250 {offsets = [0, 32], sizes = [2, 32], strides = [1, 1]} : vector<2x128xf32> to vector<2x32xf32>
    %253 = vector.extract_strided_slice %250 {offsets = [0, 96], sizes = [2, 32], strides = [1, 1]} : vector<2x128xf32> to vector<2x32xf32>
    %254 = vector.extract_strided_slice %243 {offsets = [0, 64], sizes = [2, 32], strides = [1, 1]} : vector<2x128xf32> to vector<2x32xf32>
    %255 = math.tanh %254 : vector<2x32xf32>
    %256 = arith.mulf %252, %218 : vector<2x32xf32>
    %257 = arith.mulf %251, %255 : vector<2x32xf32>
    %258 = arith.addf %256, %257 : vector<2x32xf32>
    %259 = math.tanh %258 : vector<2x32xf32>
    %260 = arith.mulf %253, %259 : vector<2x32xf32>
    %cst_68 = arith.constant dense<0.000000e+00> : vector<2x128xf32>
    %261 = tpu.matmul %260, %2, %cst_68 {dimension_numbers = #tpu.dot_dimension_numbers<[1], [0], [0], [1], [0, 0, 1, 1], [], []>} : vector<2x32xf32>, vector<32x128xf32>, vector<2x128xf32> -> vector<2x128xf32>
    %262 = arith.addf %261, %5 : vector<2x128xf32>
    %cst_69 = arith.constant dense<0.000000e+00> : vector<2x128xf32>
    %263 = tpu.matmul %241, %1, %cst_69 {dimension_numbers = #tpu.dot_dimension_numbers<[1], [0], [0], [1], [0, 0, 1, 1], [], []>} : vector<2x32xf32>, vector<32x128xf32>, vector<2x128xf32> -> vector<2x128xf32>
    %264 = arith.addf %222, %263 : vector<2x128xf32>
    %cst_70 = arith.constant 5.000000e-01 : f32
    %265 = vector.broadcast %cst_70 : f32 to vector<2x128xf32>
    %266 = arith.mulf %265, %264 : vector<2x128xf32>
    %267 = math.tanh %266 : vector<2x128xf32>
    %cst_71 = arith.constant 1.000000e+00 : f32
    %268 = vector.broadcast %cst_71 : f32 to vector<2x128xf32>
    %269 = arith.addf %267, %268 : vector<2x128xf32>
    %cst_72 = arith.constant 5.000000e-01 : f32
    %270 = vector.broadcast %cst_72 : f32 to vector<2x128xf32>
    %271 = arith.mulf %270, %269 : vector<2x128xf32>
    %272 = vector.extract_strided_slice %271 {offsets = [0, 0], sizes = [2, 32], strides = [1, 1]} : vector<2x128xf32> to vector<2x32xf32>
    %273 = vector.extract_strided_slice %271 {offsets = [0, 32], sizes = [2, 32], strides = [1, 1]} : vector<2x128xf32> to vector<2x32xf32>
    %274 = vector.extract_strided_slice %271 {offsets = [0, 96], sizes = [2, 32], strides = [1, 1]} : vector<2x128xf32> to vector<2x32xf32>
    %275 = vector.extract_strided_slice %264 {offsets = [0, 64], sizes = [2, 32], strides = [1, 1]} : vector<2x128xf32> to vector<2x32xf32>
    %276 = math.tanh %275 : vector<2x32xf32>
    %277 = arith.mulf %273, %239 : vector<2x32xf32>
    %278 = arith.mulf %272, %276 : vector<2x32xf32>
    %279 = arith.addf %277, %278 : vector<2x32xf32>
    %280 = math.tanh %279 : vector<2x32xf32>
    %281 = arith.mulf %274, %280 : vector<2x32xf32>
    %cst_73 = arith.constant dense<0.000000e+00> : vector<2x128xf32>
    %282 = tpu.matmul %260, %0, %cst_73 {dimension_numbers = #tpu.dot_dimension_numbers<[1], [0], [0], [1], [0, 0, 1, 1], [], []>} : vector<2x32xf32>, vector<32x128xf32>, vector<2x128xf32> -> vector<2x128xf32>
    %283 = arith.addf %20, %282 : vector<2x128xf32>
    %cst_74 = arith.constant 5.000000e-01 : f32
    %284 = vector.broadcast %cst_74 : f32 to vector<2x128xf32>
    %285 = arith.mulf %284, %283 : vector<2x128xf32>
    %286 = math.tanh %285 : vector<2x128xf32>
    %cst_75 = arith.constant 1.000000e+00 : f32
    %287 = vector.broadcast %cst_75 : f32 to vector<2x128xf32>
    %288 = arith.addf %286, %287 : vector<2x128xf32>
    %cst_76 = arith.constant 5.000000e-01 : f32
    %289 = vector.broadcast %cst_76 : f32 to vector<2x128xf32>
    %290 = arith.mulf %289, %288 : vector<2x128xf32>
    %291 = vector.extract_strided_slice %290 {offsets = [0, 0], sizes = [2, 32], strides = [1, 1]} : vector<2x128xf32> to vector<2x32xf32>
    %292 = vector.extract_strided_slice %290 {offsets = [0, 32], sizes = [2, 32], strides = [1, 1]} : vector<2x128xf32> to vector<2x32xf32>
    %293 = vector.extract_strided_slice %290 {offsets = [0, 96], sizes = [2, 32], strides = [1, 1]} : vector<2x128xf32> to vector<2x32xf32>
    %294 = vector.extract_strided_slice %283 {offsets = [0, 64], sizes = [2, 32], strides = [1, 1]} : vector<2x128xf32> to vector<2x32xf32>
    %295 = math.tanh %294 : vector<2x32xf32>
    %296 = arith.mulf %292, %258 : vector<2x32xf32>
    %297 = arith.mulf %291, %295 : vector<2x32xf32>
    %298 = arith.addf %296, %297 : vector<2x32xf32>
    %299 = math.tanh %298 : vector<2x32xf32>
    %300 = arith.mulf %293, %299 : vector<2x32xf32>
    %cst_77 = arith.constant dense<0.000000e+00> : vector<2x128xf32>
    %301 = tpu.matmul %300, %2, %cst_77 {dimension_numbers = #tpu.dot_dimension_numbers<[1], [0], [0], [1], [0, 0, 1, 1], [], []>} : vector<2x32xf32>, vector<32x128xf32>, vector<2x128xf32> -> vector<2x128xf32>
    %302 = arith.addf %301, %5 : vector<2x128xf32>
    %cst_78 = arith.constant dense<0.000000e+00> : vector<2x128xf32>
    %303 = tpu.matmul %281, %1, %cst_78 {dimension_numbers = #tpu.dot_dimension_numbers<[1], [0], [0], [1], [0, 0, 1, 1], [], []>} : vector<2x32xf32>, vector<32x128xf32>, vector<2x128xf32> -> vector<2x128xf32>
    %304 = arith.addf %262, %303 : vector<2x128xf32>
    %cst_79 = arith.constant 5.000000e-01 : f32
    %305 = vector.broadcast %cst_79 : f32 to vector<2x128xf32>
    %306 = arith.mulf %305, %304 : vector<2x128xf32>
    %307 = math.tanh %306 : vector<2x128xf32>
    %cst_80 = arith.constant 1.000000e+00 : f32
    %308 = vector.broadcast %cst_80 : f32 to vector<2x128xf32>
    %309 = arith.addf %307, %308 : vector<2x128xf32>
    %cst_81 = arith.constant 5.000000e-01 : f32
    %310 = vector.broadcast %cst_81 : f32 to vector<2x128xf32>
    %311 = arith.mulf %310, %309 : vector<2x128xf32>
    %312 = vector.extract_strided_slice %311 {offsets = [0, 0], sizes = [2, 32], strides = [1, 1]} : vector<2x128xf32> to vector<2x32xf32>
    %313 = vector.extract_strided_slice %311 {offsets = [0, 32], sizes = [2, 32], strides = [1, 1]} : vector<2x128xf32> to vector<2x32xf32>
    %314 = vector.extract_strided_slice %311 {offsets = [0, 96], sizes = [2, 32], strides = [1, 1]} : vector<2x128xf32> to vector<2x32xf32>
    %315 = vector.extract_strided_slice %304 {offsets = [0, 64], sizes = [2, 32], strides = [1, 1]} : vector<2x128xf32> to vector<2x32xf32>
    %316 = math.tanh %315 : vector<2x32xf32>
    %317 = arith.mulf %313, %279 : vector<2x32xf32>
    %318 = arith.mulf %312, %316 : vector<2x32xf32>
    %319 = arith.addf %317, %318 : vector<2x32xf32>
    %320 = math.tanh %319 : vector<2x32xf32>
    %321 = arith.mulf %314, %320 : vector<2x32xf32>
    %cst_82 = arith.constant dense<0.000000e+00> : vector<2x128xf32>
    %322 = tpu.matmul %321, %1, %cst_82 {dimension_numbers = #tpu.dot_dimension_numbers<[1], [0], [0], [1], [0, 0, 1, 1], [], []>} : vector<2x32xf32>, vector<32x128xf32>, vector<2x128xf32> -> vector<2x128xf32>
    %323 = arith.addf %302, %322 : vector<2x128xf32>
    %cst_83 = arith.constant 5.000000e-01 : f32
    %324 = vector.broadcast %cst_83 : f32 to vector<2x128xf32>
    %325 = arith.mulf %324, %323 : vector<2x128xf32>
    %326 = math.tanh %325 : vector<2x128xf32>
    %cst_84 = arith.constant 1.000000e+00 : f32
    %327 = vector.broadcast %cst_84 : f32 to vector<2x128xf32>
    %328 = arith.addf %326, %327 : vector<2x128xf32>
    %cst_85 = arith.constant 5.000000e-01 : f32
    %329 = vector.broadcast %cst_85 : f32 to vector<2x128xf32>
    %330 = arith.mulf %329, %328 : vector<2x128xf32>
    %331 = vector.extract_strided_slice %330 {offsets = [0, 0], sizes = [2, 32], strides = [1, 1]} : vector<2x128xf32> to vector<2x32xf32>
    %332 = vector.extract_strided_slice %330 {offsets = [0, 32], sizes = [2, 32], strides = [1, 1]} : vector<2x128xf32> to vector<2x32xf32>
    %333 = vector.extract_strided_slice %330 {offsets = [0, 96], sizes = [2, 32], strides = [1, 1]} : vector<2x128xf32> to vector<2x32xf32>
    %334 = vector.extract_strided_slice %323 {offsets = [0, 64], sizes = [2, 32], strides = [1, 1]} : vector<2x128xf32> to vector<2x32xf32>
    %335 = math.tanh %334 : vector<2x32xf32>
    %336 = arith.mulf %332, %319 : vector<2x32xf32>
    %337 = arith.mulf %331, %335 : vector<2x32xf32>
    %338 = arith.addf %336, %337 : vector<2x32xf32>
    %339 = math.tanh %338 : vector<2x32xf32>
    %340 = arith.mulf %333, %339 : vector<2x32xf32>
    %341 = tpu.concatenate %81, %121, %161, %201, %241, %281, %321, %340 in 0 : vector<2x32xf32>, vector<2x32xf32>, vector<2x32xf32>, vector<2x32xf32>, vector<2x32xf32>, vector<2x32xf32>, vector<2x32xf32>, vector<2x32xf32> -> vector<16x32xf32>
    %c0_86 = arith.constant 0 : index
    %c0_87 = arith.constant 0 : index
    %342 = vector.load %arg7[%c0_86, %c0_87] : memref<32x128xf32, #tpu.memory_space<vmem>>, vector<32x128xf32>
    %cst_88 = arith.constant dense<0.000000e+00> : vector<16x128xf32>
    %343 = tpu.matmul %341, %342, %cst_88 {dimension_numbers = #tpu.dot_dimension_numbers<[1], [0], [0], [1], [0, 0, 1, 1], [], []>} : vector<16x32xf32>, vector<32x128xf32>, vector<16x128xf32> -> vector<16x128xf32>
    %c0_89 = arith.constant 0 : index
    %c0_90 = arith.constant 0 : index
    %344 = vector.load %arg8[%c0_89, %c0_90] : memref<1x128xf32, #tpu.memory_space<vmem>>, vector<1x128xf32>
    %345 = vector.broadcast %344 : vector<1x128xf32> to vector<16x128xf32>
    %346 = arith.addf %343, %345 : vector<16x128xf32>
    %c0_91 = arith.constant 0 : index
    %c0_92 = arith.constant 0 : index
    %347 = vector.load %arg9[%c0_91, %c0_92] : memref<16x128xf32, #tpu.memory_space<vmem>>, vector<16x128xf32>
    tpu.vector_store %arg9[%c0_91, %c0_92], %346 {strides = array<i32>} : memref<16x128xf32, #tpu.memory_space<vmem>>, vector<16x128xf32>,
    return
  }
}

</mosaic_0001>

<llo_original>
// kernel: tpu_custom_call.1
$region0: #{tpu_custom_call.1}
  #allocation0 [shape = 'u32[]', space=smem, size = 0x4, offset = 0x4, fixed_abs, tag = 'smem constant byte address 0x4 - core index']
  #allocation1 [shape = 'u32[72,128]{1,0:T(1,128)}', space=vmem, size = 0x9000, scoped, tag = 'internal scratch']
  %s0 = inlined_call_operand.hbm [shape: f32[2,16], index: 0, kind: input, shape index: {}]
  %s1 = inlined_call_operand.hbm [shape: f32[16,1024], index: 1, kind: input, shape index: {}]
  %s2 = inlined_call_operand.hbm [shape: f32[1,1024], index: 2, kind: input, shape index: {}]
  %s3 = inlined_call_operand.hbm [shape: f32[32,128], index: 3, kind: input, shape index: {}]
  %s4 = inlined_call_operand.hbm [shape: f32[32,128], index: 4, kind: input, shape index: {}]
  %s5 = inlined_call_operand.hbm [shape: f32[32,128], index: 5, kind: input, shape index: {}]
  %s6 = inlined_call_operand.vmem [shape: f32[1,128], index: 6, kind: input, shape index: {}]
  %s7 = inlined_call_operand.hbm [shape: f32[32,128], index: 7, kind: input, shape index: {}]
  %s8 = inlined_call_operand.vmem [shape: f32[1,128], index: 8, kind: input, shape index: {}]
  %s9 = inlined_call_operand.hbm [shape: f32[16,128], index: 9, kind: output, shape index: {}]
  %s10 = sld [smem:[#allocation0]]
  $region74: #{tpu_custom_call.1} parent=0
    _
  %s12 = ssub.s32 1, %s10
  %s13 = scalar_select 0, %s12, %s10
  $region1: #{tpu_custom_call.1} parent=0
    #allocation2 [shape = 'u8[1024]{0}', space=vmem, size = 0x400, scoped, tag = 'input window, operand 0, single buffered']
    #allocation3 [shape = 's32[1]{0}', space=sflag, size = 0x4, scoped, tag = 'scoped memory for tpu_custom_call.1']
    #allocation4 [shape = 's32[1]{0}', space=sflag, size = 0x4, scoped, tag = 'scoped memory for tpu_custom_call.1']
    #allocation5 [shape = 'u8[65536]{0}', space=vmem, size = 0x10000, scoped, tag = 'input window, operand 1, single buffered']
    #allocation6 [shape = 's32[1]{0}', space=sflag, size = 0x4, scoped, tag = 'scoped memory for tpu_custom_call.1']
    #allocation7 [shape = 'u8[4096]{0}', space=vmem, size = 0x1000, scoped, tag = 'input window, operand 2, single buffered']
    #allocation8 [shape = 'u8[16384]{0}', space=vmem, size = 0x4000, scoped, tag = 'input window, operand 3, single buffered']
    #allocation9 [shape = 's32[1]{0}', space=sflag, size = 0x4, scoped, tag = 'scoped memory for tpu_custom_call.1']
    #allocation10 [shape = 'u8[16384]{0}', space=vmem, size = 0x4000, scoped, tag = 'input window, operand 4, single buffered']
    #allocation11 [shape = 'u8[16384]{0}', space=vmem, size = 0x4000, scoped, tag = 'input window, operand 5, single buffered']
    #allocation12 [shape = 's32[1]{0}', space=sflag, size = 0x4, scoped, tag = 'scoped memory for tpu_custom_call.1']
    #allocation13 [shape = 'u8[16384]{0}', space=vmem, size = 0x4000, scoped, tag = 'input window, operand 7, single buffered']
    #allocation14 [shape = 'u8[8192]{0}', space=vmem, size = 0x2000, scoped, tag = 'output window, operand 0, single buffered']
    %14 = vsyncpa [#allocation3], 0
    %15 = vsyncpa [#allocation6], 0
    %16 = vsyncpa [#allocation9], 0
    %17 = vsyncpa [#allocation12], 0
    %18 = vsyncpa [#allocation4], 0
    // Predicated region
    $region2: #{tpu_custom_call.1} parent=1 // pred_check
      _
    $region3: #{tpu_custom_call.1} parent=1 // pred_check_branch
      %20 = sbr.rel (0) target = $region5
    $region4: #{tpu_custom_call.1} parent=1 // pred_region
      %22 = vsyncadd [#allocation3], 0
      %s24 = sshll.u32 %s0, 4
      %s25 = int_to_ptr.hbm [resolvable:$true] %s24
      %s26 = sshll.u32 [#allocation2], 4
      %s27 = int_to_ptr.vmem [resolvable:$true] %s26
      %29 = dma.hbm_to_vmem [thread:$0]  %s25, 32, %s27, [#allocation3]
    $region5: #{tpu_custom_call.1} parent=1 // pred_fallthru
      _
    // Predicated region
    $region6: #{tpu_custom_call.1} parent=1 // pred_check
      _
    $region7: #{tpu_custom_call.1} parent=1 // pred_check_branch
      %31 = sbr.rel (0) target = $region9
    $region8: #{tpu_custom_call.1} parent=1 // pred_region
      %33 = vsyncadd [#allocation6], 0
      %s34 = sshll.u32 %s1, 4
      %s35 = int_to_ptr.hbm [resolvable:$true] %s34
      %s36 = sshll.u32 [#allocation5], 4
      %s37 = int_to_ptr.vmem [resolvable:$true] %s36
      %42 = dma.hbm_to_vmem [thread:$0]  %s35, 2048, %s37, [#allocation6], 1024, 1024, 64
    $region9: #{tpu_custom_call.1} parent=1 // pred_fallthru
      _
    // Predicated region
    $region10: #{tpu_custom_call.1} parent=1 // pred_check
      _
    $region11: #{tpu_custom_call.1} parent=1 // pred_check_branch
      %44 = sbr.rel (0) target = $region13
    $region12: #{tpu_custom_call.1} parent=1 // pred_region
      %46 = vsyncadd [#allocation6], 0
      %s48 = sshll.u32 %s2, 4
      %s49 = int_to_ptr.hbm [resolvable:$true] %s48
      %s50 = sshll.u32 [#allocation7], 4
      %s51 = int_to_ptr.vmem [resolvable:$true] %s50
      %53 = dma.hbm_to_vmem [thread:$0]  %s49, 128, %s51, [#allocation6]
    $region13: #{tpu_custom_call.1} parent=1 // pred_fallthru
      _
    // Predicated region
    $region14: #{tpu_custom_call.1} parent=1 // pred_check
      _
    $region15: #{tpu_custom_call.1} parent=1 // pred_check_branch
      %55 = sbr.rel (0) target = $region17
    $region16: #{tpu_custom_call.1} parent=1 // pred_region
      %57 = vsyncadd [#allocation9], 0
      %s58 = sshll.u32 %s3, 4
      %s59 = int_to_ptr.hbm [resolvable:$true] %s58
      %s60 = sshll.u32 [#allocation8], 4
      %s61 = int_to_ptr.vmem [resolvable:$true] %s60
      %66 = dma.hbm_to_vmem [thread:$0]  %s59, 512, %s61, [#allocation9], 128, 128, 8
    $region17: #{tpu_custom_call.1} parent=1 // pred_fallthru
      _
    // Predicated region
    $region18: #{tpu_custom_call.1} parent=1 // pred_check
      _
    $region19: #{tpu_custom_call.1} parent=1 // pred_check_branch
      %68 = sbr.rel (0) target = $region21
    $region20: #{tpu_custom_call.1} parent=1 // pred_region
      %70 = vsyncadd [#allocation9], 0
      %s71 = sshll.u32 %s4, 4
      %s72 = int_to_ptr.hbm [resolvable:$true] %s71
      %s73 = sshll.u32 [#allocation10], 4
      %s74 = int_to_ptr.vmem [resolvable:$true] %s73
      %79 = dma.hbm_to_vmem [thread:$0]  %s72, 512, %s74, [#allocation9], 128, 128, 8
    $region21: #{tpu_custom_call.1} parent=1 // pred_fallthru
      _
    // Predicated region
    $region22: #{tpu_custom_call.1} parent=1 // pred_check
      _
    $region23: #{tpu_custom_call.1} parent=1 // pred_check_branch
      %81 = sbr.rel (0) target = $region25
    $region24: #{tpu_custom_call.1} parent=1 // pred_region
      %83 = vsyncadd [#allocation12], 0
      %s84 = sshll.u32 %s5, 4
      %s85 = int_to_ptr.hbm [resolvable:$true] %s84
      %s86 = sshll.u32 [#allocation11], 4
      %s87 = int_to_ptr.vmem [resolvable:$true] %s86
      %92 = dma.hbm_to_vmem [thread:$0]  %s85, 512, %s87, [#allocation12], 128, 128, 8
    $region25: #{tpu_custom_call.1} parent=1 // pred_fallthru
      _
    // Predicated region
    $region26: #{tpu_custom_call.1} parent=1 // pred_check
      _
    $region27: #{tpu_custom_call.1} parent=1 // pred_check_branch
      %94 = sbr.rel (0) target = $region29
    $region28: #{tpu_custom_call.1} parent=1 // pred_region
      _
    $region29: #{tpu_custom_call.1} parent=1 // pred_fallthru
      _
    // Predicated region
    $region30: #{tpu_custom_call.1} parent=1 // pred_check
      _
    $region31: #{tpu_custom_call.1} parent=1 // pred_check_branch
      %96 = sbr.rel (0) target = $region33
    $region32: #{tpu_custom_call.1} parent=1 // pred_region
      %98 = vsyncadd [#allocation12], 0
      %s99 = sshll.u32 %s7, 4
      %s100 = int_to_ptr.hbm [resolvable:$true] %s99
      %s101 = sshll.u32 [#allocation13], 4
      %s102 = int_to_ptr.vmem [resolvable:$true] %s101
      %107 = dma.hbm_to_vmem [thread:$0]  %s100, 512, %s102, [#allocation12], 128, 128, 8
    $region33: #{tpu_custom_call.1} parent=1 // pred_fallthru
      _
    // Predicated region
    $region34: #{tpu_custom_call.1} parent=1 // pred_check
      _
    $region35: #{tpu_custom_call.1} parent=1 // pred_check_branch
      %109 = sbr.rel (0) target = $region37
    $region36: #{tpu_custom_call.1} parent=1 // pred_region
      _
    $region37: #{tpu_custom_call.1} parent=1 // pred_fallthru
      _
    // Predicated region
    $region38: #{tpu_custom_call.1} parent=1 // pred_check
      _
    $region39: #{tpu_custom_call.1} parent=1 // pred_check_branch
      %111 = sbr.rel (0) target = $region41
    $region40: #{tpu_custom_call.1} parent=1 // pred_region
      %113 = dma.done [#allocation3], 32
    $region41: #{tpu_custom_call.1} parent=1 // pred_fallthru
      _
    // Predicated region
    $region42: #{tpu_custom_call.1} parent=1 // pred_check
      _
    $region43: #{tpu_custom_call.1} parent=1 // pred_check_branch
      %115 = sbr.rel (0) target = $region45
    $region44: #{tpu_custom_call.1} parent=1 // pred_region
      %117 = dma.done [#allocation6], 2048
    $region45: #{tpu_custom_call.1} parent=1 // pred_fallthru
      _
    // Predicated region
    $region46: #{tpu_custom_call.1} parent=1 // pred_check
      _
    $region47: #{tpu_custom_call.1} parent=1 // pred_check_branch
      %119 = sbr.rel (0) target = $region49
    $region48: #{tpu_custom_call.1} parent=1 // pred_region
      %121 = dma.done [#allocation6], 128
    $region49: #{tpu_custom_call.1} parent=1 // pred_fallthru
      _
    // Predicated region
    $region50: #{tpu_custom_call.1} parent=1 // pred_check
      _
    $region51: #{tpu_custom_call.1} parent=1 // pred_check_branch
      %123 = sbr.rel (0) target = $region53
    $region52: #{tpu_custom_call.1} parent=1 // pred_region
      %125 = dma.done [#allocation9], 512
    $region53: #{tpu_custom_call.1} parent=1 // pred_fallthru
      _
    // Predicated region
    $region54: #{tpu_custom_call.1} parent=1 // pred_check
      _
    $region55: #{tpu_custom_call.1} parent=1 // pred_check_branch
      %127 = sbr.rel (0) target = $region57
    $region56: #{tpu_custom_call.1} parent=1 // pred_region
      %129 = dma.done [#allocation9], 512
    $region57: #{tpu_custom_call.1} parent=1 // pred_fallthru
      _
    // Predicated region
    $region58: #{tpu_custom_call.1} parent=1 // pred_check
      _
    $region59: #{tpu_custom_call.1} parent=1 // pred_check_branch
      %131 = sbr.rel (0) target = $region61
    $region60: #{tpu_custom_call.1} parent=1 // pred_region
      %133 = dma.done [#allocation12], 512
    $region61: #{tpu_custom_call.1} parent=1 // pred_fallthru
      _
    // Predicated region
    $region62: #{tpu_custom_call.1} parent=1 // pred_check
      _
    $region63: #{tpu_custom_call.1} parent=1 // pred_check_branch
      %135 = sbr.rel (0) target = $region65
    $region64: #{tpu_custom_call.1} parent=1 // pred_region
      %137 = dma.done [#allocation12], 512
    $region65: #{tpu_custom_call.1} parent=1 // pred_fallthru
      _
    %v138 = vld [vmem:[#allocation8] sm:$0xff]
    %v139 = vld [vmem:[#allocation8 + $0x8] sm:$0xff]
    %v140 = vld [vmem:[#allocation8 + $0x10] sm:$0xff]
    %v141 = vld [vmem:[#allocation8 + $0x18] sm:$0xff]
    %v142 = vld [vmem:[#allocation11] sm:$0xff]
    %v143 = vld [vmem:[#allocation11 + $0x8] sm:$0xff]
    %v144 = vld [vmem:[#allocation11 + $0x10] sm:$0xff]
    %v145 = vld [vmem:[#allocation11 + $0x18] sm:$0xff]
    %v146 = vld [vmem:[#allocation10] sm:$0xff]
    %v147 = vld [vmem:[#allocation10 + $0x8] sm:$0xff]
    %v148 = vld [vmem:[#allocation10 + $0x10] sm:$0xff]
    %v149 = vld [vmem:[#allocation10 + $0x18] sm:$0xff]
    %v150 = vld [vmem:[%s6] sm:$0x1]
    %v152 = vperm.slane %v150, 0
    %v154 = vld [vmem:[#allocation2] sm:$0x3]
    %v155 = vld [vmem:[#allocation5] sm:$0xff]
    %v156 = vld [vmem:[#allocation5 + $0x8] sm:$0xff]
    %v157 = vld [vmem:[#allocation5 + $0x10] sm:$0xff]
    %v158 = vld [vmem:[#allocation5 + $0x18] sm:$0xff]
    %v159 = vld [vmem:[#allocation5 + $0x20] sm:$0xff]
    %v160 = vld [vmem:[#allocation5 + $0x28] sm:$0xff]
    %v161 = vld [vmem:[#allocation5 + $0x30] sm:$0xff]
    %v162 = vld [vmem:[#allocation5 + $0x38] sm:$0xff]
    %v163 = vld [vmem:[#allocation5 + $0x40] sm:$0xff]
    %v164 = vld [vmem:[#allocation5 + $0x48] sm:$0xff]
    %v165 = vld [vmem:[#allocation5 + $0x50] sm:$0xff]
    %v166 = vld [vmem:[#allocation5 + $0x58] sm:$0xff]
    %v167 = vld [vmem:[#allocation5 + $0x60] sm:$0xff]
    %v168 = vld [vmem:[#allocation5 + $0x68] sm:$0xff]
    %v169 = vld [vmem:[#allocation5 + $0x70] sm:$0xff]
    %v170 = vld [vmem:[#allocation5 + $0x78] sm:$0xff]
    %v171 = vld [vmem:[#allocation7] sm:$0xff]
    %v173 = vperm.slane %v171, 0
    %v174 = vperm.slane %v171, 1
    %v175 = vperm.slane %v171, 2
    %v176 = vperm.slane %v171, 3
    %v177 = vperm.slane %v171, 4
    %v178 = vperm.slane %v171, 5
    %v179 = vperm.slane %v171, 6
    %v180 = vperm.slane %v171, 7
    %vm189 = vcmask 130048
    %v191 = vsel %vm189, %v154, 0
    %193 = vmatpush.msra.mxu0 0.0
    %194 = vmatpush.msra.mxu0 0.0
    %195 = vmatpush.msra.mxu0 0.0
    %196 = vmatpush.msra.mxu0 0.0
    %197 = vmatpush.msra.mxu0 0.0
    %198 = vmatpush.msra.mxu0 0.0
    %199 = vmatpush.msra.mxu0 0.0
    %200 = vmatpush.msra.mxu0 0.0
    %201 = vmatpush.msra.mxu0 0.0
    %202 = vmatpush.msra.mxu0 0.0
    %203 = vmatpush.msra.mxu0 0.0
    %204 = vmatpush.msra.mxu0 0.0
    %205 = vmatpush.msra.mxu0 0.0
    %206 = vmatpush.msra.mxu0 0.0
    %207 = vmatpush.msra.mxu0 %v163
    %208 = vmatpush.msra.mxu0 %v155
    %209 = vmatmul.f32.gmra.mxu0 %v191
    %v210 = vpop.f32.mrf.mxu0
    %v211 = vadd.f32 %v173, %v210
    %212 = vdwg.mxu0
    %213 = vmatpush.msra.mxu0 0.0
    %214 = vmatpush.msra.mxu0 0.0
    %215 = vmatpush.msra.mxu0 0.0
    %216 = vmatpush.msra.mxu0 0.0
    %217 = vmatpush.msra.mxu0 0.0
    %218 = vmatpush.msra.mxu0 0.0
    %219 = vmatpush.msra.mxu0 0.0
    %220 = vmatpush.msra.mxu0 0.0
    %221 = vmatpush.msra.mxu0 0.0
    %222 = vmatpush.msra.mxu0 0.0
    %223 = vmatpush.msra.mxu0 0.0
    %224 = vmatpush.msra.mxu0 0.0
    %225 = vmatpush.msra.mxu0 0.0
    %226 = vmatpush.msra.mxu0 0.0
    %227 = vmatpush.msra.mxu0 %v164
    %228 = vmatpush.msra.mxu0 %v156
    %229 = vmatmul.f32.gmra.mxu0 %v191
    %v230 = vpop.f32.mrf.mxu0
    %v231 = vadd.f32 %v174, %v230
    %232 = vdwg.mxu0
    %233 = vmatpush.msra.mxu0 0.0
    %234 = vmatpush.msra.mxu0 0.0
    %235 = vmatpush.msra.mxu0 0.0
    %236 = vmatpush.msra.mxu0 0.0
    %237 = vmatpush.msra.mxu0 0.0
    %238 = vmatpush.msra.mxu0 0.0
    %239 = vmatpush.msra.mxu0 0.0
    %240 = vmatpush.msra.mxu0 0.0
    %241 = vmatpush.msra.mxu0 0.0
    %242 = vmatpush.msra.mxu0 0.0
    %243 = vmatpush.msra.mxu0 0.0
    %244 = vmatpush.msra.mxu0 0.0
    %245 = vmatpush.msra.mxu0 0.0
    %246 = vmatpush.msra.mxu0 0.0
    %247 = vmatpush.msra.mxu0 %v165
    %248 = vmatpush.msra.mxu0 %v157
    %249 = vmatmul.f32.gmra.mxu0 %v191
    %v250 = vpop.f32.mrf.mxu0
    %v251 = vadd.f32 %v175, %v250
    %252 = vdwg.mxu0
    %253 = vmatpush.msra.mxu0 0.0
    %254 = vmatpush.msra.mxu0 0.0
    %255 = vmatpush.msra.mxu0 0.0
    %256 = vmatpush.msra.mxu0 0.0
    %257 = vmatpush.msra.mxu0 0.0
    %258 = vmatpush.msra.mxu0 0.0
    %259 = vmatpush.msra.mxu0 0.0
    %260 = vmatpush.msra.mxu0 0.0
    %261 = vmatpush.msra.mxu0 0.0
    %262 = vmatpush.msra.mxu0 0.0
    %263 = vmatpush.msra.mxu0 0.0
    %264 = vmatpush.msra.mxu0 0.0
    %265 = vmatpush.msra.mxu0 0.0
    %266 = vmatpush.msra.mxu0 0.0
    %267 = vmatpush.msra.mxu0 %v166
    %268 = vmatpush.msra.mxu0 %v158
    %269 = vmatmul.f32.gmra.mxu0 %v191
    %v270 = vpop.f32.mrf.mxu0
    %v271 = vadd.f32 %v176, %v270
    %272 = vdwg.mxu0
    %273 = vmatpush.msra.mxu0 0.0
    %274 = vmatpush.msra.mxu0 0.0
    %275 = vmatpush.msra.mxu0 0.0
    %276 = vmatpush.msra.mxu0 0.0
    %277 = vmatpush.msra.mxu0 0.0
    %278 = vmatpush.msra.mxu0 0.0
    %279 = vmatpush.msra.mxu0 0.0
    %280 = vmatpush.msra.mxu0 0.0
    %281 = vmatpush.msra.mxu0 0.0
    %282 = vmatpush.msra.mxu0 0.0
    %283 = vmatpush.msra.mxu0 0.0
    %284 = vmatpush.msra.mxu0 0.0
    %285 = vmatpush.msra.mxu0 0.0
    %286 = vmatpush.msra.mxu0 0.0
    %287 = vmatpush.msra.mxu0 %v167
    %288 = vmatpush.msra.mxu0 %v159
    %289 = vmatmul.f32.gmra.mxu0 %v191
    %v290 = vpop.f32.mrf.mxu0
    %v291 = vadd.f32 %v177, %v290
    %292 = vdwg.mxu0
    %293 = vmatpush.msra.mxu0 0.0
    %294 = vmatpush.msra.mxu0 0.0
    %295 = vmatpush.msra.mxu0 0.0
    %296 = vmatpush.msra.mxu0 0.0
    %297 = vmatpush.msra.mxu0 0.0
    %298 = vmatpush.msra.mxu0 0.0
    %299 = vmatpush.msra.mxu0 0.0
    %300 = vmatpush.msra.mxu0 0.0
    %301 = vmatpush.msra.mxu0 0.0
    %302 = vmatpush.msra.mxu0 0.0
    %303 = vmatpush.msra.mxu0 0.0
    %304 = vmatpush.msra.mxu0 0.0
    %305 = vmatpush.msra.mxu0 0.0
    %306 = vmatpush.msra.mxu0 0.0
    %307 = vmatpush.msra.mxu0 %v168
    %308 = vmatpush.msra.mxu0 %v160
    %309 = vmatmul.f32.gmra.mxu0 %v191
    %v310 = vpop.f32.mrf.mxu0
    %v311 = vadd.f32 %v178, %v310
    %312 = vdwg.mxu0
    %313 = vmatpush.msra.mxu0 0.0
    %314 = vmatpush.msra.mxu0 0.0
    %315 = vmatpush.msra.mxu0 0.0
    %316 = vmatpush.msra.mxu0 0.0
    %317 = vmatpush.msra.mxu0 0.0
    %318 = vmatpush.msra.mxu0 0.0
    %319 = vmatpush.msra.mxu0 0.0
    %320 = vmatpush.msra.mxu0 0.0
    %321 = vmatpush.msra.mxu0 0.0
    %322 = vmatpush.msra.mxu0 0.0
    %323 = vmatpush.msra.mxu0 0.0
    %324 = vmatpush.msra.mxu0 0.0
    %325 = vmatpush.msra.mxu0 0.0
    %326 = vmatpush.msra.mxu0 0.0
    %327 = vmatpush.msra.mxu0 %v169
    %328 = vmatpush.msra.mxu0 %v161
    %329 = vmatmul.f32.gmra.mxu0 %v191
    %v330 = vpop.f32.mrf.mxu0
    %v331 = vadd.f32 %v179, %v330
    %332 = vdwg.mxu0
    %333 = vmatpush.msra.mxu0 0.0
    %334 = vmatpush.msra.mxu0 0.0
    %335 = vmatpush.msra.mxu0 0.0
    %336 = vmatpush.msra.mxu0 0.0
    %337 = vmatpush.msra.mxu0 0.0
    %338 = vmatpush.msra.mxu0 0.0
    %339 = vmatpush.msra.mxu0 0.0
    %340 = vmatpush.msra.mxu0 0.0
    %341 = vmatpush.msra.mxu0 0.0
    %342 = vmatpush.msra.mxu0 0.0
    %343 = vmatpush.msra.mxu0 0.0
    %344 = vmatpush.msra.mxu0 0.0
    %345 = vmatpush.msra.mxu0 0.0
    %346 = vmatpush.msra.mxu0 0.0
    %347 = vmatpush.msra.mxu0 %v170
    %348 = vmatpush.msra.mxu0 %v162
    %349 = vmatmul.f32.gmra.mxu0 %v191
    %v350 = vpop.f32.mrf.mxu0
    %v351 = vadd.f32 %v180, %v350
    %352 = vdwg.mxu0
    %vm353 = vcmask 261120
    %v355 = vsel %vm353, 0.0, 0
    %357 = vmatpush.msra.mxu0 0.0
    %358 = vmatpush.msra.mxu0 0.0
    %359 = vmatpush.msra.mxu0 0.0
    %360 = vmatpush.msra.mxu0 0.0
    %361 = vmatpush.msra.mxu0 0.0
    %362 = vmatpush.msra.mxu0 0.0
    %363 = vmatpush.msra.mxu0 0.0
    %364 = vmatpush.msra.mxu0 0.0
    %365 = vmatpush.msra.mxu0 0.0
    %366 = vmatpush.msra.mxu0 0.0
    %367 = vmatpush.msra.mxu0 0.0
    %368 = vmatpush.msra.mxu0 0.0
    %369 = vmatpush.msra.mxu0 %v141
    %370 = vmatpush.msra.mxu0 %v140
    %371 = vmatpush.msra.mxu0 %v139
    %372 = vmatpush.msra.mxu0 %v138
    %373 = vmatmul.f32.gmra.mxu0 %v355
    %v374 = vpop.f32.mrf.mxu0
    %v375 = vadd.f32 0.0, %v374
    %376 = vdwg.mxu0
    %v377 = vadd.f32 %v211, %v375
    %v378 = vmul.f32 %v377, 0.5
    %v379 = vtanh.pop %v378
    %v380 = vadd.f32 %v379, 1.0
    %v381 = vmul.f32 %v380, 0.5
    %v382 = vtanh.pop %v377
    %v383 = vmul.f32 %v381, 0.0
    %385 = vrot.lane.b32.xlu0 %v382, 64
    %v386 = vpop.permute.xlu0 %385
    %v388 = vmul.f32 %v381, %v386
    %390 = vrot.lane.b32.xlu0 %v388, 32
    %v391 = vpop.permute.xlu0 %390
    %v393 = vadd.f32 %v383, %v391
    %v394 = vtanh.pop %v393
    %396 = vrot.lane.b32.xlu0 %v394, 64
    %v397 = vpop.permute.xlu0 %396
    %v399 = vmul.f32 %v381, %v397
    %401 = vrot.lane.b32.xlu0 %v399, 32
    %v402 = vpop.permute.xlu0 %401
    %v403 = vsel %vm353, %v402, 0
    %405 = vmatpush.msra.mxu0 0.0
    %406 = vmatpush.msra.mxu0 0.0
    %407 = vmatpush.msra.mxu0 0.0
    %408 = vmatpush.msra.mxu0 0.0
    %409 = vmatpush.msra.mxu0 0.0
    %410 = vmatpush.msra.mxu0 0.0
    %411 = vmatpush.msra.mxu0 0.0
    %412 = vmatpush.msra.mxu0 0.0
    %413 = vmatpush.msra.mxu0 0.0
    %414 = vmatpush.msra.mxu0 0.0
    %415 = vmatpush.msra.mxu0 0.0
    %416 = vmatpush.msra.mxu0 0.0
    %417 = vmatpush.msra.mxu0 %v149
    %418 = vmatpush.msra.mxu0 %v148
    %419 = vmatpush.msra.mxu0 %v147
    %420 = vmatpush.msra.mxu0 %v146
    %421 = vmatmul.f32.gmra.mxu0 %v403
    %v422 = vpop.f32.mrf.mxu0
    %v423 = vadd.f32 %v152, %v422
    %424 = vdwg.mxu0
    %425 = vmatpush.msra.mxu0 0.0
    %426 = vmatpush.msra.mxu0 0.0
    %427 = vmatpush.msra.mxu0 0.0
    %428 = vmatpush.msra.mxu0 0.0
    %429 = vmatpush.msra.mxu0 0.0
    %430 = vmatpush.msra.mxu0 0.0
    %431 = vmatpush.msra.mxu0 0.0
    %432 = vmatpush.msra.mxu0 0.0
    %433 = vmatpush.msra.mxu0 0.0
    %434 = vmatpush.msra.mxu0 0.0
    %435 = vmatpush.msra.mxu0 0.0
    %436 = vmatpush.msra.mxu0 0.0
    %437 = vmatpush.msra.mxu0 %v141
    %438 = vmatpush.msra.mxu0 %v140
    %439 = vmatpush.msra.mxu0 %v139
    %440 = vmatpush.msra.mxu0 %v138
    %441 = vmatmul.f32.gmra.mxu0 %v403
    %v442 = vpop.f32.mrf.mxu0
    %v443 = vadd.f32 0.0, %v442
    %444 = vdwg.mxu0
    %v445 = vadd.f32 %v231, %v443
    %v446 = vmul.f32 %v445, 0.5
    %v447 = vtanh.pop %v446
    %v448 = vadd.f32 %v447, 1.0
    %v449 = vmul.f32 %v448, 0.5
    %v450 = vtanh.pop %v445
    %v451 = vmul.f32 %v449, %v393
    %453 = vrot.lane.b32.xlu0 %v450, 64
    %v454 = vpop.permute.xlu0 %453
    %v456 = vmul.f32 %v449, %v454
    %458 = vrot.lane.b32.xlu0 %v456, 32
    %v459 = vpop.permute.xlu0 %458
    %v461 = vadd.f32 %v451, %v459
    %v462 = vtanh.pop %v461
    %464 = vrot.lane.b32.xlu0 %v462, 64
    %v465 = vpop.permute.xlu0 %464
    %v467 = vmul.f32 %v449, %v465
    %469 = vrot.lane.b32.xlu0 %v467, 32
    %v470 = vpop.permute.xlu0 %469
    %v471 = vsel %vm353, %v470, 0
    %473 = vmatpush.msra.mxu0 0.0
    %474 = vmatpush.msra.mxu0 0.0
    %475 = vmatpush.msra.mxu0 0.0
    %476 = vmatpush.msra.mxu0 0.0
    %477 = vmatpush.msra.mxu0 0.0
    %478 = vmatpush.msra.mxu0 0.0
    %479 = vmatpush.msra.mxu0 0.0
    %480 = vmatpush.msra.mxu0 0.0
    %481 = vmatpush.msra.mxu0 0.0
    %482 = vmatpush.msra.mxu0 0.0
    %483 = vmatpush.msra.mxu0 0.0
    %484 = vmatpush.msra.mxu0 0.0
    %485 = vmatpush.msra.mxu0 %v149
    %486 = vmatpush.msra.mxu0 %v148
    %487 = vmatpush.msra.mxu0 %v147
    %488 = vmatpush.msra.mxu0 %v146
    %489 = vmatmul.f32.gmra.mxu0 %v471
    %v490 = vpop.f32.mrf.mxu0
    %v491 = vadd.f32 %v152, %v490
    %492 = vdwg.mxu0
    %493 = vmatpush.msra.mxu0 0.0
    %494 = vmatpush.msra.mxu0 0.0
    %495 = vmatpush.msra.mxu0 0.0
    %496 = vmatpush.msra.mxu0 0.0
    %497 = vmatpush.msra.mxu0 0.0
    %498 = vmatpush.msra.mxu0 0.0
    %499 = vmatpush.msra.mxu0 0.0
    %500 = vmatpush.msra.mxu0 0.0
    %501 = vmatpush.msra.mxu0 0.0
    %502 = vmatpush.msra.mxu0 0.0
    %503 = vmatpush.msra.mxu0 0.0
    %504 = vmatpush.msra.mxu0 0.0
    %505 = vmatpush.msra.mxu0 %v145
    %506 = vmatpush.msra.mxu0 %v144
    %507 = vmatpush.msra.mxu0 %v143
    %508 = vmatpush.msra.mxu0 %v142
    %509 = vmatmul.f32.gmra.mxu0 %v355
    %v510 = vpop.f32.mrf.mxu0
    %v511 = vadd.f32 0.0, %v510
    %512 = vdwg.mxu0
    %v513 = vadd.f32 %v423, %v511
    %v514 = vmul.f32 %v513, 0.5
    %v515 = vtanh.pop %v514
    %v516 = vadd.f32 %v515, 1.0
    %v517 = vmul.f32 %v516, 0.5
    %v518 = vtanh.pop %v513
    %v519 = vmul.f32 %v517, 0.0
    %521 = vrot.lane.b32.xlu0 %v518, 64
    %v522 = vpop.permute.xlu0 %521
    %v524 = vmul.f32 %v517, %v522
    %526 = vrot.lane.b32.xlu0 %v524, 32
    %v527 = vpop.permute.xlu0 %526
    %v529 = vadd.f32 %v519, %v527
    %v530 = vtanh.pop %v529
    %532 = vrot.lane.b32.xlu0 %v530, 64
    %v533 = vpop.permute.xlu0 %532
    %v535 = vmul.f32 %v517, %v533
    %536 = vmatpush.msra.mxu0 0.0
    %537 = vmatpush.msra.mxu0 0.0
    %538 = vmatpush.msra.mxu0 0.0
    %539 = vmatpush.msra.mxu0 0.0
    %540 = vmatpush.msra.mxu0 0.0
    %541 = vmatpush.msra.mxu0 0.0
    %542 = vmatpush.msra.mxu0 0.0
    %543 = vmatpush.msra.mxu0 0.0
    %544 = vmatpush.msra.mxu0 0.0
    %545 = vmatpush.msra.mxu0 0.0
    %546 = vmatpush.msra.mxu0 0.0
    %547 = vmatpush.msra.mxu0 0.0
    %548 = vmatpush.msra.mxu0 %v141
    %549 = vmatpush.msra.mxu0 %v140
    %550 = vmatpush.msra.mxu0 %v139
    %551 = vmatpush.msra.mxu0 %v138
    %552 = vmatmul.f32.gmra.mxu0 %v471
    %v553 = vpop.f32.mrf.mxu0
    %v554 = vadd.f32 0.0, %v553
    %555 = vdwg.mxu0
    %v556 = vadd.f32 %v251, %v554
    %v557 = vmul.f32 %v556, 0.5
    %v558 = vtanh.pop %v557
    %v559 = vadd.f32 %v558, 1.0
    %v560 = vmul.f32 %v559, 0.5
    %v561 = vtanh.pop %v556
    %v562 = vmul.f32 %v560, %v461
    %564 = vrot.lane.b32.xlu0 %v561, 64
    %v565 = vpop.permute.xlu0 %564
    %v567 = vmul.f32 %v560, %v565
    %569 = vrot.lane.b32.xlu0 %v567, 32
    %v570 = vpop.permute.xlu0 %569
    %v572 = vadd.f32 %v562, %v570
    %v573 = vtanh.pop %v572
    %575 = vrot.lane.b32.xlu0 %v573, 64
    %v576 = vpop.permute.xlu0 %575
    %v578 = vmul.f32 %v560, %v576
    %580 = vrot.lane.b32.xlu0 %v578, 32
    %v581 = vpop.permute.xlu0 %580
    %v582 = vsel %vm353, %v581, 0
    %584 = vmatpush.msra.mxu0 0.0
    %585 = vmatpush.msra.mxu0 0.0
    %586 = vmatpush.msra.mxu0 0.0
    %587 = vmatpush.msra.mxu0 0.0
    %588 = vmatpush.msra.mxu0 0.0
    %589 = vmatpush.msra.mxu0 0.0
    %590 = vmatpush.msra.mxu0 0.0
    %591 = vmatpush.msra.mxu0 0.0
    %592 = vmatpush.msra.mxu0 0.0
    %593 = vmatpush.msra.mxu0 0.0
    %594 = vmatpush.msra.mxu0 0.0
    %595 = vmatpush.msra.mxu0 0.0
    %596 = vmatpush.msra.mxu0 %v149
    %597 = vmatpush.msra.mxu0 %v148
    %598 = vmatpush.msra.mxu0 %v147
    %599 = vmatpush.msra.mxu0 %v146
    %600 = vmatmul.f32.gmra.mxu0 %v582
    %v601 = vpop.f32.mrf.mxu0
    %v602 = vadd.f32 %v152, %v601
    %603 = vdwg.mxu0
    %605 = vrot.lane.b32.xlu0 %v535, 32
    %v606 = vpop.permute.xlu0 %605
    %v607 = vsel %vm353, %v606, 0
    %609 = vmatpush.msra.mxu0 0.0
    %610 = vmatpush.msra.mxu0 0.0
    %611 = vmatpush.msra.mxu0 0.0
    %612 = vmatpush.msra.mxu0 0.0
    %613 = vmatpush.msra.mxu0 0.0
    %614 = vmatpush.msra.mxu0 0.0
    %615 = vmatpush.msra.mxu0 0.0
    %616 = vmatpush.msra.mxu0 0.0
    %617 = vmatpush.msra.mxu0 0.0
    %618 = vmatpush.msra.mxu0 0.0
    %619 = vmatpush.msra.mxu0 0.0
    %620 = vmatpush.msra.mxu0 0.0
    %621 = vmatpush.msra.mxu0 %v145
    %622 = vmatpush.msra.mxu0 %v144
    %623 = vmatpush.msra.mxu0 %v143
    %624 = vmatpush.msra.mxu0 %v142
    %625 = vmatmul.f32.gmra.mxu0 %v607
    %v626 = vpop.f32.mrf.mxu0
    %v627 = vadd.f32 0.0, %v626
    %628 = vdwg.mxu0
    %v629 = vadd.f32 %v491, %v627
    %v630 = vmul.f32 %v629, 0.5
    %v631 = vtanh.pop %v630
    %v632 = vadd.f32 %v631, 1.0
    %v633 = vmul.f32 %v632, 0.5
    %v634 = vtanh.pop %v629
    %v635 = vmul.f32 %v633, %v529
    %637 = vrot.lane.b32.xlu0 %v634, 64
    %v638 = vpop.permute.xlu0 %637
    %v640 = vmul.f32 %v633, %v638
    %642 = vrot.lane.b32.xlu0 %v640, 32
    %v643 = vpop.permute.xlu0 %642
    %v645 = vadd.f32 %v635, %v643
    %v646 = vtanh.pop %v645
    %648 = vrot.lane.b32.xlu0 %v646, 64
    %v649 = vpop.permute.xlu0 %648
    %v651 = vmul.f32 %v633, %v649
    %652 = vmatpush.msra.mxu0 0.0
    %653 = vmatpush.msra.mxu0 0.0
    %654 = vmatpush.msra.mxu0 0.0
    %655 = vmatpush.msra.mxu0 0.0
    %656 = vmatpush.msra.mxu0 0.0
    %657 = vmatpush.msra.mxu0 0.0
    %658 = vmatpush.msra.mxu0 0.0
    %659 = vmatpush.msra.mxu0 0.0
    %660 = vmatpush.msra.mxu0 0.0
    %661 = vmatpush.msra.mxu0 0.0
    %662 = vmatpush.msra.mxu0 0.0
    %663 = vmatpush.msra.mxu0 0.0
    %664 = vmatpush.msra.mxu0 %v141
    %665 = vmatpush.msra.mxu0 %v140
    %666 = vmatpush.msra.mxu0 %v139
    %667 = vmatpush.msra.mxu0 %v138
    %668 = vmatmul.f32.gmra.mxu0 %v582
    %v669 = vpop.f32.mrf.mxu0
    %v670 = vadd.f32 0.0, %v669
    %671 = vdwg.mxu0
    %v672 = vadd.f32 %v271, %v670
    %v673 = vmul.f32 %v672, 0.5
    %v674 = vtanh.pop %v673
    %v675 = vadd.f32 %v674, 1.0
    %v676 = vmul.f32 %v675, 0.5
    %v677 = vtanh.pop %v672
    %v678 = vmul.f32 %v676, %v572
    %680 = vrot.lane.b32.xlu0 %v677, 64
    %v681 = vpop.permute.xlu0 %680
    %v683 = vmul.f32 %v676, %v681
    %685 = vrot.lane.b32.xlu0 %v683, 32
    %v686 = vpop.permute.xlu0 %685
    %v688 = vadd.f32 %v678, %v686
    %v689 = vtanh.pop %v688
    %691 = vrot.lane.b32.xlu0 %v689, 64
    %v692 = vpop.permute.xlu0 %691
    %v694 = vmul.f32 %v676, %v692
    %696 = vrot.lane.b32.xlu0 %v694, 32
    %v697 = vpop.permute.xlu0 %696
    %v698 = vsel %vm353, %v697, 0
    %700 = vmatpush.msra.mxu0 0.0
    %701 = vmatpush.msra.mxu0 0.0
    %702 = vmatpush.msra.mxu0 0.0
    %703 = vmatpush.msra.mxu0 0.0
    %704 = vmatpush.msra.mxu0 0.0
    %705 = vmatpush.msra.mxu0 0.0
    %706 = vmatpush.msra.mxu0 0.0
    %707 = vmatpush.msra.mxu0 0.0
    %708 = vmatpush.msra.mxu0 0.0
    %709 = vmatpush.msra.mxu0 0.0
    %710 = vmatpush.msra.mxu0 0.0
    %711 = vmatpush.msra.mxu0 0.0
    %712 = vmatpush.msra.mxu0 %v149
    %713 = vmatpush.msra.mxu0 %v148
    %714 = vmatpush.msra.mxu0 %v147
    %715 = vmatpush.msra.mxu0 %v146
    %716 = vmatmul.f32.gmra.mxu0 %v698
    %v717 = vpop.f32.mrf.mxu0
    %v718 = vadd.f32 %v152, %v717
    %719 = vdwg.mxu0
    %721 = vrot.lane.b32.xlu0 %v651, 32
    %v722 = vpop.permute.xlu0 %721
    %v723 = vsel %vm353, %v722, 0
    %725 = vmatpush.msra.mxu0 0.0
    %726 = vmatpush.msra.mxu0 0.0
    %727 = vmatpush.msra.mxu0 0.0
    %728 = vmatpush.msra.mxu0 0.0
    %729 = vmatpush.msra.mxu0 0.0
    %730 = vmatpush.msra.mxu0 0.0
    %731 = vmatpush.msra.mxu0 0.0
    %732 = vmatpush.msra.mxu0 0.0
    %733 = vmatpush.msra.mxu0 0.0
    %734 = vmatpush.msra.mxu0 0.0
    %735 = vmatpush.msra.mxu0 0.0
    %736 = vmatpush.msra.mxu0 0.0
    %737 = vmatpush.msra.mxu0 %v145
    %738 = vmatpush.msra.mxu0 %v144
    %739 = vmatpush.msra.mxu0 %v143
    %740 = vmatpush.msra.mxu0 %v142
    %741 = vmatmul.f32.gmra.mxu0 %v723
    %v742 = vpop.f32.mrf.mxu0
    %v743 = vadd.f32 0.0, %v742
    %744 = vdwg.mxu0
    %v745 = vadd.f32 %v602, %v743
    %v746 = vmul.f32 %v745, 0.5
    %v747 = vtanh.pop %v746
    %v748 = vadd.f32 %v747, 1.0
    %v749 = vmul.f32 %v748, 0.5
    %v750 = vtanh.pop %v745
    %v751 = vmul.f32 %v749, %v645
    %753 = vrot.lane.b32.xlu0 %v750, 64
    %v754 = vpop.permute.xlu0 %753
    %v756 = vmul.f32 %v749, %v754
    %758 = vrot.lane.b32.xlu0 %v756, 32
    %v759 = vpop.permute.xlu0 %758
    %v761 = vadd.f32 %v751, %v759
    %v762 = vtanh.pop %v761
    %764 = vrot.lane.b32.xlu0 %v762, 64
    %v765 = vpop.permute.xlu0 %764
    %v767 = vmul.f32 %v749, %v765
    %768 = vmatpush.msra.mxu0 0.0
    %769 = vmatpush.msra.mxu0 0.0
    %770 = vmatpush.msra.mxu0 0.0
    %771 = vmatpush.msra.mxu0 0.0
    %772 = vmatpush.msra.mxu0 0.0
    %773 = vmatpush.msra.mxu0 0.0
    %774 = vmatpush.msra.mxu0 0.0
    %775 = vmatpush.msra.mxu0 0.0
    %776 = vmatpush.msra.mxu0 0.0
    %777 = vmatpush.msra.mxu0 0.0
    %778 = vmatpush.msra.mxu0 0.0
    %779 = vmatpush.msra.mxu0 0.0
    %780 = vmatpush.msra.mxu0 %v141
    %781 = vmatpush.msra.mxu0 %v140
    %782 = vmatpush.msra.mxu0 %v139
    %783 = vmatpush.msra.mxu0 %v138
    %784 = vmatmul.f32.gmra.mxu0 %v698
    %v785 = vpop.f32.mrf.mxu0
    %v786 = vadd.f32 0.0, %v785
    %787 = vdwg.mxu0
    %v788 = vadd.f32 %v291, %v786
    %v789 = vmul.f32 %v788, 0.5
    %v790 = vtanh.pop %v789
    %v791 = vadd.f32 %v790, 1.0
    %v792 = vmul.f32 %v791, 0.5
    %v793 = vtanh.pop %v788
    %v794 = vmul.f32 %v792, %v688
    %796 = vrot.lane.b32.xlu0 %v793, 64
    %v797 = vpop.permute.xlu0 %796
    %v799 = vmul.f32 %v792, %v797
    %801 = vrot.lane.b32.xlu0 %v799, 32
    %v802 = vpop.permute.xlu0 %801
    %v804 = vadd.f32 %v794, %v802
    %v805 = vtanh.pop %v804
    %807 = vrot.lane.b32.xlu0 %v805, 64
    %v808 = vpop.permute.xlu0 %807
    %v810 = vmul.f32 %v792, %v808
    %812 = vrot.lane.b32.xlu0 %v810, 32
    %v813 = vpop.permute.xlu0 %812
    %v814 = vsel %vm353, %v813, 0
    %816 = vmatpush.msra.mxu0 0.0
    %817 = vmatpush.msra.mxu0 0.0
    %818 = vmatpush.msra.mxu0 0.0
    %819 = vmatpush.msra.mxu0 0.0
    %820 = vmatpush.msra.mxu0 0.0
    %821 = vmatpush.msra.mxu0 0.0
    %822 = vmatpush.msra.mxu0 0.0
    %823 = vmatpush.msra.mxu0 0.0
    %824 = vmatpush.msra.mxu0 0.0
    %825 = vmatpush.msra.mxu0 0.0
    %826 = vmatpush.msra.mxu0 0.0
    %827 = vmatpush.msra.mxu0 0.0
    %828 = vmatpush.msra.mxu0 %v149
    %829 = vmatpush.msra.mxu0 %v148
    %830 = vmatpush.msra.mxu0 %v147
    %831 = vmatpush.msra.mxu0 %v146
    %832 = vmatmul.f32.gmra.mxu0 %v814
    %v833 = vpop.f32.mrf.mxu0
    %v834 = vadd.f32 %v152, %v833
    %835 = vdwg.mxu0
    %837 = vrot.lane.b32.xlu0 %v767, 32
    %v838 = vpop.permute.xlu0 %837
    %v839 = vsel %vm353, %v838, 0
    %841 = vmatpush.msra.mxu0 0.0
    %842 = vmatpush.msra.mxu0 0.0
    %843 = vmatpush.msra.mxu0 0.0
    %844 = vmatpush.msra.mxu0 0.0
    %845 = vmatpush.msra.mxu0 0.0
    %846 = vmatpush.msra.mxu0 0.0
    %847 = vmatpush.msra.mxu0 0.0
    %848 = vmatpush.msra.mxu0 0.0
    %849 = vmatpush.msra.mxu0 0.0
    %850 = vmatpush.msra.mxu0 0.0
    %851 = vmatpush.msra.mxu0 0.0
    %852 = vmatpush.msra.mxu0 0.0
    %853 = vmatpush.msra.mxu0 %v145
    %854 = vmatpush.msra.mxu0 %v144
    %855 = vmatpush.msra.mxu0 %v143
    %856 = vmatpush.msra.mxu0 %v142
    %857 = vmatmul.f32.gmra.mxu0 %v839
    %v858 = vpop.f32.mrf.mxu0
    %v859 = vadd.f32 0.0, %v858
    %860 = vdwg.mxu0
    %v861 = vadd.f32 %v718, %v859
    %v862 = vmul.f32 %v861, 0.5
    %v863 = vtanh.pop %v862
    %v864 = vadd.f32 %v863, 1.0
    %v865 = vmul.f32 %v864, 0.5
    %v866 = vtanh.pop %v861
    %v867 = vmul.f32 %v865, %v761
    %869 = vrot.lane.b32.xlu0 %v866, 64
    %v870 = vpop.permute.xlu0 %869
    %v872 = vmul.f32 %v865, %v870
    %874 = vrot.lane.b32.xlu0 %v872, 32
    %v875 = vpop.permute.xlu0 %874
    %v877 = vadd.f32 %v867, %v875
    %v878 = vtanh.pop %v877
    %880 = vrot.lane.b32.xlu0 %v878, 64
    %v881 = vpop.permute.xlu0 %880
    %v883 = vmul.f32 %v865, %v881
    %884 = vmatpush.msra.mxu0 0.0
    %885 = vmatpush.msra.mxu0 0.0
    %886 = vmatpush.msra.mxu0 0.0
    %887 = vmatpush.msra.mxu0 0.0
    %888 = vmatpush.msra.mxu0 0.0
    %889 = vmatpush.msra.mxu0 0.0
    %890 = vmatpush.msra.mxu0 0.0
    %891 = vmatpush.msra.mxu0 0.0
    %892 = vmatpush.msra.mxu0 0.0
    %893 = vmatpush.msra.mxu0 0.0
    %894 = vmatpush.msra.mxu0 0.0
    %895 = vmatpush.msra.mxu0 0.0
    %896 = vmatpush.msra.mxu0 %v141
    %897 = vmatpush.msra.mxu0 %v140
    %898 = vmatpush.msra.mxu0 %v139
    %899 = vmatpush.msra.mxu0 %v138
    %900 = vmatmul.f32.gmra.mxu0 %v814
    %v901 = vpop.f32.mrf.mxu0
    %v902 = vadd.f32 0.0, %v901
    %903 = vdwg.mxu0
    %v904 = vadd.f32 %v311, %v902
    %v905 = vmul.f32 %v904, 0.5
    %v906 = vtanh.pop %v905
    %v907 = vadd.f32 %v906, 1.0
    %v908 = vmul.f32 %v907, 0.5
    %v909 = vtanh.pop %v904
    %v910 = vmul.f32 %v908, %v804
    %912 = vrot.lane.b32.xlu0 %v909, 64
    %v913 = vpop.permute.xlu0 %912
    %v915 = vmul.f32 %v908, %v913
    %917 = vrot.lane.b32.xlu0 %v915, 32
    %v918 = vpop.permute.xlu0 %917
    %v920 = vadd.f32 %v910, %v918
    %v921 = vtanh.pop %v920
    %923 = vrot.lane.b32.xlu0 %v921, 64
    %v924 = vpop.permute.xlu0 %923
    %v926 = vmul.f32 %v908, %v924
    %928 = vrot.lane.b32.xlu0 %v926, 32
    %v929 = vpop.permute.xlu0 %928
    %v930 = vsel %vm353, %v929, 0
    %932 = vmatpush.msra.mxu0 0.0
    %933 = vmatpush.msra.mxu0 0.0
    %934 = vmatpush.msra.mxu0 0.0
    %935 = vmatpush.msra.mxu0 0.0
    %936 = vmatpush.msra.mxu0 0.0
    %937 = vmatpush.msra.mxu0 0.0
    %938 = vmatpush.msra.mxu0 0.0
    %939 = vmatpush.msra.mxu0 0.0
    %940 = vmatpush.msra.mxu0 0.0
    %941 = vmatpush.msra.mxu0 0.0
    %942 = vmatpush.msra.mxu0 0.0
    %943 = vmatpush.msra.mxu0 0.0
    %944 = vmatpush.msra.mxu0 %v149
    %945 = vmatpush.msra.mxu0 %v148
    %946 = vmatpush.msra.mxu0 %v147
    %947 = vmatpush.msra.mxu0 %v146
    %948 = vmatmul.f32.gmra.mxu0 %v930
    %v949 = vpop.f32.mrf.mxu0
    %v950 = vadd.f32 %v152, %v949
    %951 = vdwg.mxu0
    %953 = vrot.lane.b32.xlu0 %v883, 32
    %v954 = vpop.permute.xlu0 %953
    %v955 = vsel %vm353, %v954, 0
    %957 = vmatpush.msra.mxu0 0.0
    %958 = vmatpush.msra.mxu0 0.0
    %959 = vmatpush.msra.mxu0 0.0
    %960 = vmatpush.msra.mxu0 0.0
    %961 = vmatpush.msra.mxu0 0.0
    %962 = vmatpush.msra.mxu0 0.0
    %963 = vmatpush.msra.mxu0 0.0
    %964 = vmatpush.msra.mxu0 0.0
    %965 = vmatpush.msra.mxu0 0.0
    %966 = vmatpush.msra.mxu0 0.0
    %967 = vmatpush.msra.mxu0 0.0
    %968 = vmatpush.msra.mxu0 0.0
    %969 = vmatpush.msra.mxu0 %v145
    %970 = vmatpush.msra.mxu0 %v144
    %971 = vmatpush.msra.mxu0 %v143
    %972 = vmatpush.msra.mxu0 %v142
    %973 = vmatmul.f32.gmra.mxu0 %v955
    %v974 = vpop.f32.mrf.mxu0
    %v975 = vadd.f32 0.0, %v974
    %976 = vdwg.mxu0
    %v977 = vadd.f32 %v834, %v975
    %v978 = vmul.f32 %v977, 0.5
    %v979 = vtanh.pop %v978
    %v980 = vadd.f32 %v979, 1.0
    %v981 = vmul.f32 %v980, 0.5
    %v982 = vtanh.pop %v977
    %v983 = vmul.f32 %v981, %v877
    %985 = vrot.lane.b32.xlu0 %v982, 64
    %v986 = vpop.permute.xlu0 %985
    %v988 = vmul.f32 %v981, %v986
    %990 = vrot.lane.b32.xlu0 %v988, 32
    %v991 = vpop.permute.xlu0 %990
    %v993 = vadd.f32 %v983, %v991
    %v994 = vtanh.pop %v993
    %996 = vrot.lane.b32.xlu0 %v994, 64
    %v997 = vpop.permute.xlu0 %996
    %v999 = vmul.f32 %v981, %v997
    %1000 = vmatpush.msra.mxu0 0.0
    %1001 = vmatpush.msra.mxu0 0.0
    %1002 = vmatpush.msra.mxu0 0.0
    %1003 = vmatpush.msra.mxu0 0.0
    %1004 = vmatpush.msra.mxu0 0.0
    %1005 = vmatpush.msra.mxu0 0.0
    %1006 = vmatpush.msra.mxu0 0.0
    %1007 = vmatpush.msra.mxu0 0.0
    %1008 = vmatpush.msra.mxu0 0.0
    %1009 = vmatpush.msra.mxu0 0.0
    %1010 = vmatpush.msra.mxu0 0.0
    %1011 = vmatpush.msra.mxu0 0.0
    %1012 = vmatpush.msra.mxu0 %v141
    %1013 = vmatpush.msra.mxu0 %v140
    %1014 = vmatpush.msra.mxu0 %v139
    %1015 = vmatpush.msra.mxu0 %v138
    %1016 = vmatmul.f32.gmra.mxu0 %v930
    %v1017 = vpop.f32.mrf.mxu0
    %v1018 = vadd.f32 0.0, %v1017
    %1019 = vdwg.mxu0
    %v1020 = vadd.f32 %v331, %v1018
    %v1021 = vmul.f32 %v1020, 0.5
    %v1022 = vtanh.pop %v1021
    %v1023 = vadd.f32 %v1022, 1.0
    %v1024 = vmul.f32 %v1023, 0.5
    %v1025 = vtanh.pop %v1020
    %v1026 = vmul.f32 %v1024, %v920
    %1028 = vrot.lane.b32.xlu0 %v1025, 64
    %v1029 = vpop.permute.xlu0 %1028
    %v1031 = vmul.f32 %v1024, %v1029
    %1033 = vrot.lane.b32.xlu0 %v1031, 32
    %v1034 = vpop.permute.xlu0 %1033
    %v1036 = vadd.f32 %v1026, %v1034
    %v1037 = vtanh.pop %v1036
    %1039 = vrot.lane.b32.xlu0 %v1037, 64
    %v1040 = vpop.permute.xlu0 %1039
    %v1042 = vmul.f32 %v1024, %v1040
    %1044 = vrot.lane.b32.xlu0 %v1042, 32
    %v1045 = vpop.permute.xlu0 %1044
    %v1046 = vsel %vm353, %v1045, 0
    %1048 = vmatpush.msra.mxu0 0.0
    %1049 = vmatpush.msra.mxu0 0.0
    %1050 = vmatpush.msra.mxu0 0.0
    %1051 = vmatpush.msra.mxu0 0.0
    %1052 = vmatpush.msra.mxu0 0.0
    %1053 = vmatpush.msra.mxu0 0.0
    %1054 = vmatpush.msra.mxu0 0.0
    %1055 = vmatpush.msra.mxu0 0.0
    %1056 = vmatpush.msra.mxu0 0.0
    %1057 = vmatpush.msra.mxu0 0.0
    %1058 = vmatpush.msra.mxu0 0.0
    %1059 = vmatpush.msra.mxu0 0.0
    %1060 = vmatpush.msra.mxu0 %v149
    %1061 = vmatpush.msra.mxu0 %v148
    %1062 = vmatpush.msra.mxu0 %v147
    %1063 = vmatpush.msra.mxu0 %v146
    %1064 = vmatmul.f32.gmra.mxu0 %v1046
    %v1065 = vpop.f32.mrf.mxu0
    %v1066 = vadd.f32 %v152, %v1065
    %1067 = vdwg.mxu0
    %1069 = vrot.lane.b32.xlu0 %v999, 32
    %v1070 = vpop.permute.xlu0 %1069
    %v1071 = vsel %vm353, %v1070, 0
    %1073 = vmatpush.msra.mxu0 0.0
    %1074 = vmatpush.msra.mxu0 0.0
    %1075 = vmatpush.msra.mxu0 0.0
    %1076 = vmatpush.msra.mxu0 0.0
    %1077 = vmatpush.msra.mxu0 0.0
    %1078 = vmatpush.msra.mxu0 0.0
    %1079 = vmatpush.msra.mxu0 0.0
    %1080 = vmatpush.msra.mxu0 0.0
    %1081 = vmatpush.msra.mxu0 0.0
    %1082 = vmatpush.msra.mxu0 0.0
    %1083 = vmatpush.msra.mxu0 0.0
    %1084 = vmatpush.msra.mxu0 0.0
    %1085 = vmatpush.msra.mxu0 %v145
    %1086 = vmatpush.msra.mxu0 %v144
    %1087 = vmatpush.msra.mxu0 %v143
    %1088 = vmatpush.msra.mxu0 %v142
    %1089 = vmatmul.f32.gmra.mxu0 %v1071
    %v1090 = vpop.f32.mrf.mxu0
    %v1091 = vadd.f32 0.0, %v1090
    %1092 = vdwg.mxu0
    %v1093 = vadd.f32 %v950, %v1091
    %v1094 = vmul.f32 %v1093, 0.5
    %v1095 = vtanh.pop %v1094
    %v1096 = vadd.f32 %v1095, 1.0
    %v1097 = vmul.f32 %v1096, 0.5
    %v1098 = vtanh.pop %v1093
    %v1099 = vmul.f32 %v1097, %v993
    %1101 = vrot.lane.b32.xlu0 %v1098, 64
    %v1102 = vpop.permute.xlu0 %1101
    %v1104 = vmul.f32 %v1097, %v1102
    %1106 = vrot.lane.b32.xlu0 %v1104, 32
    %v1107 = vpop.permute.xlu0 %1106
    %v1109 = vadd.f32 %v1099, %v1107
    %v1110 = vtanh.pop %v1109
    %1112 = vrot.lane.b32.xlu0 %v1110, 64
    %v1113 = vpop.permute.xlu0 %1112
    %v1115 = vmul.f32 %v1097, %v1113
    %1116 = vmatpush.msra.mxu0 0.0
    %1117 = vmatpush.msra.mxu0 0.0
    %1118 = vmatpush.msra.mxu0 0.0
    %1119 = vmatpush.msra.mxu0 0.0
    %1120 = vmatpush.msra.mxu0 0.0
    %1121 = vmatpush.msra.mxu0 0.0
    %1122 = vmatpush.msra.mxu0 0.0
    %1123 = vmatpush.msra.mxu0 0.0
    %1124 = vmatpush.msra.mxu0 0.0
    %1125 = vmatpush.msra.mxu0 0.0
    %1126 = vmatpush.msra.mxu0 0.0
    %1127 = vmatpush.msra.mxu0 0.0
    %1128 = vmatpush.msra.mxu0 %v141
    %1129 = vmatpush.msra.mxu0 %v140
    %1130 = vmatpush.msra.mxu0 %v139
    %1131 = vmatpush.msra.mxu0 %v138
    %1132 = vmatmul.f32.gmra.mxu0 %v1046
    %v1133 = vpop.f32.mrf.mxu0
    %v1134 = vadd.f32 0.0, %v1133
    %1135 = vdwg.mxu0
    %v1136 = vadd.f32 %v351, %v1134
    %v1137 = vmul.f32 %v1136, 0.5
    %v1138 = vtanh.pop %v1137
    %v1139 = vadd.f32 %v1138, 1.0
    %v1140 = vmul.f32 %v1139, 0.5
    %v1141 = vtanh.pop %v1136
    %v1142 = vmul.f32 %v1140, %v1036
    %1144 = vrot.lane.b32.xlu0 %v1141, 64
    %v1145 = vpop.permute.xlu0 %1144
    %v1147 = vmul.f32 %v1140, %v1145
    %1149 = vrot.lane.b32.xlu0 %v1147, 32
    %v1150 = vpop.permute.xlu0 %1149
    %v1152 = vadd.f32 %v1142, %v1150
    %v1153 = vtanh.pop %v1152
    %1155 = vrot.lane.b32.xlu0 %v1153, 64
    %v1156 = vpop.permute.xlu0 %1155
    %v1158 = vmul.f32 %v1140, %v1156
    %1160 = vrot.lane.b32.xlu0 %v1158, 32
    %v1161 = vpop.permute.xlu0 %1160
    %v1162 = vsel %vm353, %v1161, 0
    %1164 = vmatpush.msra.mxu0 0.0
    %1165 = vmatpush.msra.mxu0 0.0
    %1166 = vmatpush.msra.mxu0 0.0
    %1167 = vmatpush.msra.mxu0 0.0
    %1168 = vmatpush.msra.mxu0 0.0
    %1169 = vmatpush.msra.mxu0 0.0
    %1170 = vmatpush.msra.mxu0 0.0
    %1171 = vmatpush.msra.mxu0 0.0
    %1172 = vmatpush.msra.mxu0 0.0
    %1173 = vmatpush.msra.mxu0 0.0
    %1174 = vmatpush.msra.mxu0 0.0
    %1175 = vmatpush.msra.mxu0 0.0
    %1176 = vmatpush.msra.mxu0 %v149
    %1177 = vmatpush.msra.mxu0 %v148
    %1178 = vmatpush.msra.mxu0 %v147
    %1179 = vmatpush.msra.mxu0 %v146
    %1180 = vmatmul.f32.gmra.mxu0 %v1162
    %v1181 = vpop.f32.mrf.mxu0
    %v1182 = vadd.f32 %v152, %v1181
    %1183 = vdwg.mxu0
    %1185 = vrot.lane.b32.xlu0 %v1115, 32
    %v1186 = vpop.permute.xlu0 %1185
    %v1187 = vsel %vm353, %v1186, 0
    %1189 = vmatpush.msra.mxu0 0.0
    %1190 = vmatpush.msra.mxu0 0.0
    %1191 = vmatpush.msra.mxu0 0.0
    %1192 = vmatpush.msra.mxu0 0.0
    %1193 = vmatpush.msra.mxu0 0.0
    %1194 = vmatpush.msra.mxu0 0.0
    %1195 = vmatpush.msra.mxu0 0.0
    %1196 = vmatpush.msra.mxu0 0.0
    %1197 = vmatpush.msra.mxu0 0.0
    %1198 = vmatpush.msra.mxu0 0.0
    %1199 = vmatpush.msra.mxu0 0.0
    %1200 = vmatpush.msra.mxu0 0.0
    %1201 = vmatpush.msra.mxu0 %v145
    %1202 = vmatpush.msra.mxu0 %v144
    %1203 = vmatpush.msra.mxu0 %v143
    %1204 = vmatpush.msra.mxu0 %v142
    %1205 = vmatmul.f32.gmra.mxu0 %v1187
    %v1206 = vpop.f32.mrf.mxu0
    %v1207 = vadd.f32 0.0, %v1206
    %1208 = vdwg.mxu0
    %v1209 = vadd.f32 %v1066, %v1207
    %v1210 = vmul.f32 %v1209, 0.5
    %v1211 = vtanh.pop %v1210
    %v1212 = vadd.f32 %v1211, 1.0
    %v1213 = vmul.f32 %v1212, 0.5
    %v1214 = vtanh.pop %v1209
    %v1215 = vmul.f32 %v1213, %v1109
    %1217 = vrot.lane.b32.xlu0 %v1214, 64
    %v1218 = vpop.permute.xlu0 %1217
    %v1220 = vmul.f32 %v1213, %v1218
    %1222 = vrot.lane.b32.xlu0 %v1220, 32
    %v1223 = vpop.permute.xlu0 %1222
    %v1225 = vadd.f32 %v1215, %v1223
    %v1226 = vtanh.pop %v1225
    %1228 = vrot.lane.b32.xlu0 %v1226, 64
    %v1229 = vpop.permute.xlu0 %1228
    %v1231 = vmul.f32 %v1213, %v1229
    %1233 = vrot.lane.b32.xlu0 %v1231, 32
    %v1234 = vpop.permute.xlu0 %1233
    %v1235 = vsel %vm353, %v1234, 0
    %1237 = vmatpush.msra.mxu0 0.0
    %1238 = vmatpush.msra.mxu0 0.0
    %1239 = vmatpush.msra.mxu0 0.0
    %1240 = vmatpush.msra.mxu0 0.0
    %1241 = vmatpush.msra.mxu0 0.0
    %1242 = vmatpush.msra.mxu0 0.0
    %1243 = vmatpush.msra.mxu0 0.0
    %1244 = vmatpush.msra.mxu0 0.0
    %1245 = vmatpush.msra.mxu0 0.0
    %1246 = vmatpush.msra.mxu0 0.0
    %1247 = vmatpush.msra.mxu0 0.0
    %1248 = vmatpush.msra.mxu0 0.0
    %1249 = vmatpush.msra.mxu0 %v145
    %1250 = vmatpush.msra.mxu0 %v144
    %1251 = vmatpush.msra.mxu0 %v143
    %1252 = vmatpush.msra.mxu0 %v142
    %1253 = vmatmul.f32.gmra.mxu0 %v1235
    %v1254 = vpop.f32.mrf.mxu0
    %v1255 = vadd.f32 0.0, %v1254
    %1256 = vdwg.mxu0
    %v1257 = vadd.f32 %v1182, %v1255
    %v1258 = vmul.f32 %v1257, 0.5
    %v1259 = vtanh.pop %v1258
    %v1260 = vadd.f32 %v1259, 1.0
    %v1261 = vmul.f32 %v1260, 0.5
    %v1262 = vtanh.pop %v1257
    %v1263 = vmul.f32 %v1261, %v1225
    %1265 = vrot.lane.b32.xlu0 %v1262, 64
    %v1266 = vpop.permute.xlu0 %1265
    %v1268 = vmul.f32 %v1261, %v1266
    %1270 = vrot.lane.b32.xlu0 %v1268, 32
    %v1271 = vpop.permute.xlu0 %1270
    %v1273 = vadd.f32 %v1263, %v1271
    %v1274 = vtanh.pop %v1273
    %1276 = vrot.lane.b32.xlu0 %v1274, 64
    %v1277 = vpop.permute.xlu0 %1276
    %v1279 = vmul.f32 %v1261, %v1277
    %v1280 = vrot.slane %v651, 6
    %v1282 = vrot.slane %v767, 4
    %v1284 = vrot.slane %v883, 2
    %v1286 = vrot.slane %v1115, 6
    %v1288 = vrot.slane %v1231, 4
    %v1291 = vrot.slane %v1279, 2
    %vm1293 = vcmask 1041408
    %v1294 = vsel %vm1293, %v535, %v1280
    %vm1295 = vcmask 1043456
    %v1296 = vsel %vm1295, %v1294, %v1282
    %vm1297 = vcmask 1045504
    %v1298 = vsel %vm1297, %v1296, %v1284
    %v1299 = vsel %vm1293, %v999, %v1286
    %v1300 = vsel %vm1295, %v1299, %v1288
    %v1301 = vsel %vm1297, %v1300, %v1291
    %v1302 = vld [vmem:[#allocation13] sm:$0xff]
    %v1303 = vld [vmem:[#allocation13 + $0x8] sm:$0xff]
    %v1304 = vld [vmem:[#allocation13 + $0x10] sm:$0xff]
    %v1305 = vld [vmem:[#allocation13 + $0x18] sm:$0xff]
    %v1306 = vld [vmem:[%s8] sm:$0x1]
    %v1308 = vperm.slane %v1306, 0
    %1312 = vrot.lane.b32.xlu0 %v1298, 32
    %v1313 = vpop.permute.xlu0 %1312
    %1314 = vrot.lane.b32.xlu0 %v1301, 32
    %v1315 = vpop.permute.xlu0 %1314
    %v1316 = vsel %vm353, %v1313, 0
    %v1318 = vsel %vm353, %v1315, 0
    %1320 = vmatpush.msra.mxu0 0.0
    %1321 = vmatpush.msra.mxu0 0.0
    %1322 = vmatpush.msra.mxu0 0.0
    %1323 = vmatpush.msra.mxu0 0.0
    %1324 = vmatpush.msra.mxu0 0.0
    %1325 = vmatpush.msra.mxu0 0.0
    %1326 = vmatpush.msra.mxu0 0.0
    %1327 = vmatpush.msra.mxu0 0.0
    %1328 = vmatpush.msra.mxu0 0.0
    %1329 = vmatpush.msra.mxu0 0.0
    %1330 = vmatpush.msra.mxu0 0.0
    %1331 = vmatpush.msra.mxu0 0.0
    %1332 = vmatpush.msra.mxu0 %v1305
    %1333 = vmatpush.msra.mxu0 %v1304
    %1334 = vmatpush.msra.mxu0 %v1303
    %1335 = vmatpush.msra.mxu0 %v1302
    %1336 = vmatmul.f32.gmra.mxu0 %v1316
    %v1337 = vpop.f32.mrf.mxu0
    %v1338 = vadd.f32 %v1308, %v1337
    %1339 = vmatmul.f32.gmra.mxu0 %v1318
    %v1340 = vpop.f32.mrf.mxu0
    %v1341 = vadd.f32 %v1308, %v1340
    %1342 = vdwg.mxu0
    %1343 = vst [vmem:[#allocation14] sm:$0xff] %v1338
    %1344 = vst [vmem:[#allocation14 + $0x8] sm:$0xff] %v1341
    // Predicated region
    $region66: #{tpu_custom_call.1} parent=1 // pred_check
      _
    $region67: #{tpu_custom_call.1} parent=1 // pred_check_branch
      %1346 = sbr.rel (0) target = $region69
    $region68: #{tpu_custom_call.1} parent=1 // pred_region
      %1348 = vsyncadd [#allocation4], 0
      %s1349 = sshll.u32 [#allocation14], 4
      %s1350 = int_to_ptr.vmem [resolvable:$true] %s1349
      %s1351 = sshll.u32 %s9, 4
      %s1352 = int_to_ptr.hbm [resolvable:$true] %s1351
      %1357 = dma.vmem_to_hbm [thread:$0]  %s1350, 256, %s1352, [#allocation4], 128, 128, 8
    $region69: #{tpu_custom_call.1} parent=1 // pred_fallthru
      _
    // Predicated region
    $region70: #{tpu_custom_call.1} parent=1 // pred_check
      _
    $region71: #{tpu_custom_call.1} parent=1 // pred_check_branch
      %1359 = sbr.rel (0) target = $region73
    $region72: #{tpu_custom_call.1} parent=1 // pred_region
      %1361 = dma.done [#allocation4], 256
    $region73: #{tpu_custom_call.1} parent=1 // pred_fallthru
      _
    %1362 = vsyncpa [#allocation3], 1
    %1363 = vsyncpa [#allocation6], 1
    %1364 = vsyncpa [#allocation9], 1
    %1365 = vsyncpa [#allocation12], 1
    %1366 = vsyncpa [#allocation4], 1

</llo_original>
